<compile_context>
chip_gen: v7x
topology: tpu7x:2x2x1
jax: 0.10.0
libtpu: 0.0.40
codegen_flags: <defaults>
</compile_context>

<pallas_src>
import jax
import jax.numpy as jnp
from jax.experimental import pallas as pl
from jax.experimental.pallas import tpu as pltpu


def _shortcut_conv_kernel(x_ref, above_ref, below_ref, w_ref, b_ref, out_ref,
                          xpad_ref):
    # x_ref     : (1, TH, W, C)   row tile of the input (NHWC)
    # above_ref : (1, 1,  W, C)   row just above the tile (zero-masked at r == 0)
    # below_ref : (1, 1,  W, C)   row just below the tile (zero-masked at r == last)
    # w_ref     : (9*C, Cout)     conv weight, taps K-concatenated ((kh,kw) major, ci minor)
    # b_ref     : (1, Cout)
    # out_ref   : (1, TH, W, C)
    # xpad_ref  : (TH+2, W+2, C)  VMEM scratch: zero-halo padded tile
    r = pl.program_id(1)
    n_row_tiles = pl.num_programs(1)

    TH, W, C = x_ref.shape[1], x_ref.shape[2], x_ref.shape[3]
    Cout = out_ref.shape[3]

    # ---- assemble the zero-padded tile in VMEM (padding folded into kernel) ----
    # Fully re-zero each step: a cheap VMEM-only pass that keeps the scratch free
    # of cross-step state, so both grid axes remain legally "parallel".
    xpad_ref[...] = jnp.zeros_like(xpad_ref)
    xpad_ref[1:TH + 1, 1:W + 1, :] = x_ref[0]
    zero_row = jnp.zeros_like(above_ref[0, 0])
    xpad_ref[0, 1:W + 1, :] = jnp.where(r > 0, above_ref[0, 0], zero_row)
    xpad_ref[TH + 1, 1:W + 1, :] = jnp.where(r < n_row_tiles - 1,
                                             below_ref[0, 0], zero_row)

    # ---- 3x3 conv as a single matmul: K-concat of the 9 shifted taps ----------
    # Native-dtype operands, f32 accumulation via preferred_element_type.
    taps = [xpad_ref[kh:kh + TH, kw:kw + W, :]
            for kh in range(3) for kw in range(3)]
    patch = jnp.concatenate(taps, axis=-1).reshape(TH * W, 9 * C)
    conv = jnp.dot(patch, w_ref[...], preferred_element_type=jnp.float32)
    conv = conv + b_ref[...].astype(jnp.float32)            # (1, Cout) broadcasts

    # ---- fused residual add (identity taken from the same single input) -------
    out = x_ref[0].astype(jnp.float32) + conv.reshape(TH, W, Cout)
    out_ref[0] = out.astype(out_ref.dtype)


def _pick_row_tile(H, W, C, itemsize):
    """Largest divisor of H whose per-step working set (incl. the 9x im2col
    patch) fits a conservative VMEM budget (safe on v7x's 64 MiB); prefer >=2
    row tiles so the pipeline has steps to overlap and the grid can shard
    across both v7x TensorCores."""
    row_bytes = max(1, W * C * itemsize)
    budget = 12 << 20
    # ~16x tile: double-buffered in/out + padded scratch + 9x im2col patch.
    max_th = max(1, budget // (16 * row_bytes))
    th = 1
    for d in range(1, H + 1):
        if H % d == 0 and d <= max_th:
            th = d
    if th == H and H % 2 == 0 and H >= 2:
        th = H // 2
    return th


def shortcut_block(x_nchw, weight, bias):
    """y = x + Conv2d(3x3, stride 1, pad 1)(x).  x_nchw: (N, C, H, W);
    weight: (Cout, Cin, 3, 3); bias: (Cout,)."""
    N, C, H, W = x_nchw.shape
    Cout = weight.shape[0]

    # Layout glue: the kernel is NHWC end-to-end (channels on lanes).  In an
    # NHWC-native model these two transposes disappear.
    x_nhwc = jnp.transpose(x_nchw, (0, 2, 3, 1))                     # (N, H, W, C)
    # Weight reshaped ONCE to the K-concatenated (9*C, Cout) matmul layout;
    # row index = (kh*3 + kw)*C + ci, matching the in-kernel tap concat order.
    w2d = jnp.transpose(weight, (2, 3, 1, 0)).reshape(9 * C, Cout)
    b2d = bias.reshape(1, Cout)

    itemsize = jnp.dtype(x_nchw.dtype).itemsize
    th = _pick_row_tile(H, W, C, itemsize)
    n_row_tiles = H // th

    # vmem limit sized from the actual double-buffered blocks + im2col patch.
    tile_b = th * W * C * itemsize
    out_b = th * W * Cout * itemsize
    fixed_b = (9 * C * Cout + Cout) * itemsize + 2 * W * C * itemsize
    scratch_b = (th + 2) * (W + 2) * C * itemsize
    patch_b = 9 * tile_b + th * W * Cout * 4
    est = 2 * (tile_b + out_b + fixed_b) + scratch_b + patch_b
    vmem_limit = int(min(56 << 20, max(2 * est, 16 << 20)))

    out_nhwc = pl.pallas_call(
        _shortcut_conv_kernel,
        out_shape=jax.ShapeDtypeStruct((N, H, W, Cout), x_nchw.dtype),
        grid_spec=pltpu.PrefetchScalarGridSpec(
            num_scalar_prefetch=0,
            grid=(N, n_row_tiles),
            in_specs=[
                # main row tile (block index along H)
                pl.BlockSpec((1, th, W, C), lambda n, r: (n, r, 0, 0)),
                # one-row halo above / below (block size 1 -> row index; the
                # clamped out-of-range rows are zero-masked inside the kernel)
                pl.BlockSpec((1, 1, W, C),
                             lambda n, r: (n, jnp.maximum(r * th - 1, 0), 0, 0)),
                pl.BlockSpec((1, 1, W, C),
                             lambda n, r: (n, jnp.minimum((r + 1) * th, H - 1), 0, 0)),
                pl.BlockSpec((9 * C, Cout), lambda n, r: (0, 0)),
                pl.BlockSpec((1, Cout), lambda n, r: (0, 0)),
            ],
            out_specs=pl.BlockSpec((1, th, W, Cout), lambda n, r: (n, r, 0, 0)),
            scratch_shapes=[pltpu.VMEM((th + 2, W + 2, C), x_nchw.dtype)],
        ),
        compiler_params=pltpu.CompilerParams(
            dimension_semantics=("parallel", "parallel"),
            vmem_limit_bytes=vmem_limit,
        ),
    )(x_nhwc, x_nhwc, x_nhwc, w2d, b2d)

    return jnp.transpose(out_nhwc, (0, 3, 1, 2))                     # back to NCHW


def _reference(x_nchw, weight, bias):
    # Pure-JAX reference: x + conv2d(x) (stride 1, padding 1), NCHW.
    conv = jax.lax.conv_general_dilated(
        x_nchw.astype(jnp.float32), weight.astype(jnp.float32),
        window_strides=(1, 1), padding=((1, 1), (1, 1)),
        dimension_numbers=("NCHW", "OIHW", "NCHW"),
    ) + bias.astype(jnp.float32).reshape(1, -1, 1, 1)
    return (x_nchw.astype(jnp.float32) + conv).astype(x_nchw.dtype)


if __name__ == "__main__":
    key = jax.random.PRNGKey(0)
    k_x, k_w, k_b = jax.random.split(key, 3)

    N, C, H, W = 2, 4, 16, 16
    x = jax.random.normal(k_x, (N, C, H, W), dtype=jnp.float32)
    weight = jax.random.normal(k_w, (C, C, 3, 3), dtype=jnp.float32) * 0.1
    bias = jax.random.normal(k_b, (C,), dtype=jnp.float32) * 0.1

    out = jax.block_until_ready(shortcut_block(x, weight, bias))
    ref = _reference(x, weight, bias)

    assert out.shape == (N, C, H, W)
    assert jnp.allclose(out, ref, atol=1e-4, rtol=1e-4), "mismatch vs reference"
    print("KERNEL_OK")
</pallas_src>

<mosaic_0001>
module attributes {stable_mosaic.version = 11 : i64} {
  func.func @_shortcut_conv_kernel(%arg0: i32, %arg1: i32, %arg2: memref<1x8x16x4xf32, #tpu.memory_space<vmem>>, %arg3: memref<1x1x16x4xf32, #tpu.memory_space<vmem>>, %arg4: memref<1x1x16x4xf32, #tpu.memory_space<vmem>>, %arg5: memref<36x4xf32, #tpu.memory_space<vmem>>, %arg6: memref<1x4xf32, #tpu.memory_space<vmem>>, %arg7: memref<1x8x16x4xf32, #tpu.memory_space<vmem>>, %arg8: memref<10x18x4xf32, #tpu.memory_space<vmem>>) attributes {dimension_semantics = [#tpu.dimension_semantics<parallel>, #tpu.dimension_semantics<parallel>], iteration_bounds = array<i64: 2, 2>, scalar_prefetch = 0 : i64, scratch_operands = 1 : i64, tpu.core_type = #tpu.core_type<tc>, window_params = [{transform_indices = @transform_0, window_bounds = array<i64: 1, 8, 16, 4>}, {transform_indices = @transform_1, window_bounds = array<i64: 1, 1, 16, 4>}, {transform_indices = @transform_2, window_bounds = array<i64: 1, 1, 16, 4>}, {pipeline_mode = #tpu.pipeline_mode<synchronous>, transform_indices = @transform_3, window_bounds = array<i64: 36, 4>}, {pipeline_mode = #tpu.pipeline_mode<synchronous>, transform_indices = @transform_4, window_bounds = array<i64: 1, 4>}, {transform_indices = @transform_5, window_bounds = array<i64: 1, 8, 16, 4>}]} {
    %cst = arith.constant 0.000000e+00 : f32
    %0 = vector.broadcast %cst : f32 to vector<10x18x4xf32>
    %c0 = arith.constant 0 : index
    %c0_0 = arith.constant 0 : index
    %c0_1 = arith.constant 0 : index
    %1 = vector.load %arg8[%c0, %c0_0, %c0_1] : memref<10x18x4xf32, #tpu.memory_space<vmem>>, vector<10x18x4xf32>
    tpu.vector_store %arg8[%c0, %c0_0, %c0_1], %0 {strides = array<i32>} : memref<10x18x4xf32, #tpu.memory_space<vmem>>, vector<10x18x4xf32>,
    %c0_2 = arith.constant 0 : index
    %c0_3 = arith.constant 0 : index
    %c0_4 = arith.constant 0 : index
    %c0_5 = arith.constant 0 : index
    %2 = vector.load %arg2[%c0_2, %c0_3, %c0_4, %c0_5] : memref<1x8x16x4xf32, #tpu.memory_space<vmem>>, vector<1x8x16x4xf32>
    %3 = vector.shape_cast %2 : vector<1x8x16x4xf32> to vector<8x16x4xf32>
    %c1 = arith.constant 1 : index
    %c1_6 = arith.constant 1 : index
    %c0_7 = arith.constant 0 : index
    %4 = vector.load %arg8[%c1, %c1_6, %c0_7] : memref<10x18x4xf32, #tpu.memory_space<vmem>>, vector<8x16x4xf32>
    tpu.vector_store %arg8[%c1, %c1_6, %c0_7], %3 {strides = array<i32>} : memref<10x18x4xf32, #tpu.memory_space<vmem>>, vector<8x16x4xf32>,
    %cst_8 = arith.constant 0.000000e+00 : f32
    %5 = vector.broadcast %cst_8 : f32 to vector<16x4xf32>
    %c0_i32 = arith.constant 0 : i32
    %6 = arith.cmpi sgt, %arg1, %c0_i32 : i32
    %c0_9 = arith.constant 0 : index
    %c0_10 = arith.constant 0 : index
    %c0_11 = arith.constant 0 : index
    %c0_12 = arith.constant 0 : index
    %7 = vector.load %arg3[%c0_9, %c0_10, %c0_11, %c0_12] : memref<1x1x16x4xf32, #tpu.memory_space<vmem>>, vector<1x1x16x4xf32>
    %8 = vector.shape_cast %7 : vector<1x1x16x4xf32> to vector<16x4xf32>
    %9 = arith.select %6, %8, %5 : vector<16x4xf32>
    %c0_13 = arith.constant 0 : index
    %c1_14 = arith.constant 1 : index
    %c0_15 = arith.constant 0 : index
    %10 = vector.load %arg8[%c0_13, %c1_14, %c0_15] : memref<10x18x4xf32, #tpu.memory_space<vmem>>, vector<1x16x4xf32>
    %11 = vector.shape_cast %10 : vector<1x16x4xf32> to vector<16x4xf32>
    %12 = vector.shape_cast %9 : vector<16x4xf32> to vector<1x16x4xf32>
    tpu.vector_store %arg8[%c0_13, %c1_14, %c0_15], %12 {strides = array<i32>} : memref<10x18x4xf32, #tpu.memory_space<vmem>>, vector<1x16x4xf32>,
    %c1_i32 = arith.constant 1 : i32
    %13 = arith.cmpi slt, %arg1, %c1_i32 : i32
    %c0_16 = arith.constant 0 : index
    %c0_17 = arith.constant 0 : index
    %c0_18 = arith.constant 0 : index
    %c0_19 = arith.constant 0 : index
    %14 = vector.load %arg4[%c0_16, %c0_17, %c0_18, %c0_19] : memref<1x1x16x4xf32, #tpu.memory_space<vmem>>, vector<1x1x16x4xf32>
    %15 = vector.shape_cast %14 : vector<1x1x16x4xf32> to vector<16x4xf32>
    %16 = arith.select %13, %15, %5 : vector<16x4xf32>
    %c9 = arith.constant 9 : index
    %c1_20 = arith.constant 1 : index
    %c0_21 = arith.constant 0 : index
    %17 = vector.load %arg8[%c9, %c1_20, %c0_21] : memref<10x18x4xf32, #tpu.memory_space<vmem>>, vector<1x16x4xf32>
    %18 = vector.shape_cast %17 : vector<1x16x4xf32> to vector<16x4xf32>
    %19 = vector.shape_cast %16 : vector<16x4xf32> to vector<1x16x4xf32>
    tpu.vector_store %arg8[%c9, %c1_20, %c0_21], %19 {strides = array<i32>} : memref<10x18x4xf32, #tpu.memory_space<vmem>>, vector<1x16x4xf32>,
    %c0_22 = arith.constant 0 : index
    %c0_23 = arith.constant 0 : index
    %c0_24 = arith.constant 0 : index
    %20 = vector.load %arg8[%c0_22, %c0_23, %c0_24] : memref<10x18x4xf32, #tpu.memory_space<vmem>>, vector<8x16x4xf32>
    %c0_25 = arith.constant 0 : index
    %c1_26 = arith.constant 1 : index
    %c0_27 = arith.constant 0 : index
    %21 = vector.load %arg8[%c0_25, %c1_26, %c0_27] : memref<10x18x4xf32, #tpu.memory_space<vmem>>, vector<8x16x4xf32>
    %c0_28 = arith.constant 0 : index
    %c2 = arith.constant 2 : index
    %c0_29 = arith.constant 0 : index
    %22 = vector.load %arg8[%c0_28, %c2, %c0_29] : memref<10x18x4xf32, #tpu.memory_space<vmem>>, vector<8x16x4xf32>
    %c1_30 = arith.constant 1 : index
    %c0_31 = arith.constant 0 : index
    %c0_32 = arith.constant 0 : index
    %23 = vector.load %arg8[%c1_30, %c0_31, %c0_32] : memref<10x18x4xf32, #tpu.memory_space<vmem>>, vector<8x16x4xf32>
    %c1_33 = arith.constant 1 : index
    %c1_34 = arith.constant 1 : index
    %c0_35 = arith.constant 0 : index
    %24 = vector.load %arg8[%c1_33, %c1_34, %c0_35] : memref<10x18x4xf32, #tpu.memory_space<vmem>>, vector<8x16x4xf32>
    %c1_36 = arith.constant 1 : index
    %c2_37 = arith.constant 2 : index
    %c0_38 = arith.constant 0 : index
    %25 = vector.load %arg8[%c1_36, %c2_37, %c0_38] : memref<10x18x4xf32, #tpu.memory_space<vmem>>, vector<8x16x4xf32>
    %c2_39 = arith.constant 2 : index
    %c0_40 = arith.constant 0 : index
    %c0_41 = arith.constant 0 : index
    %26 = vector.load %arg8[%c2_39, %c0_40, %c0_41] : memref<10x18x4xf32, #tpu.memory_space<vmem>>, vector<8x16x4xf32>
    %c2_42 = arith.constant 2 : index
    %c1_43 = arith.constant 1 : index
    %c0_44 = arith.constant 0 : index
    %27 = vector.load %arg8[%c2_42, %c1_43, %c0_44] : memref<10x18x4xf32, #tpu.memory_space<vmem>>, vector<8x16x4xf32>
    %c2_45 = arith.constant 2 : index
    %c2_46 = arith.constant 2 : index
    %c0_47 = arith.constant 0 : index
    %28 = vector.load %arg8[%c2_45, %c2_46, %c0_47] : memref<10x18x4xf32, #tpu.memory_space<vmem>>, vector<8x16x4xf32>
    %29 = tpu.concatenate %20, %21, %22, %23, %24, %25, %26, %27, %28 in 2 : vector<8x16x4xf32>, vector<8x16x4xf32>, vector<8x16x4xf32>, vector<8x16x4xf32>, vector<8x16x4xf32>, vector<8x16x4xf32>, vector<8x16x4xf32>, vector<8x16x4xf32>, vector<8x16x4xf32> -> vector<8x16x36xf32>
    %30 = vector.shape_cast %29 : vector<8x16x36xf32> to vector<128x36xf32>
    %c0_48 = arith.constant 0 : index
    %c0_49 = arith.constant 0 : index
    %31 = vector.load %arg5[%c0_48, %c0_49] : memref<36x4xf32, #tpu.memory_space<vmem>>, vector<36x4xf32>
    %cst_50 = arith.constant dense<0.000000e+00> : vector<128x4xf32>
    %32 = tpu.matmul %30, %31, %cst_50 {dimension_numbers = #tpu.dot_dimension_numbers<[1], [0], [0], [1], [0, 0, 1, 1], [], []>} : vector<128x36xf32>, vector<36x4xf32>, vector<128x4xf32> -> vector<128x4xf32>
    %c0_51 = arith.constant 0 : index
    %c0_52 = arith.constant 0 : index
    %33 = vector.load %arg6[%c0_51, %c0_52] : memref<1x4xf32, #tpu.memory_space<vmem>>, vector<1x4xf32>
    %34 = vector.broadcast %33 : vector<1x4xf32> to vector<128x4xf32>
    %35 = arith.addf %32, %34 : vector<128x4xf32>
    %c0_53 = arith.constant 0 : index
    %c0_54 = arith.constant 0 : index
    %c0_55 = arith.constant 0 : index
    %c0_56 = arith.constant 0 : index
    %36 = vector.load %arg2[%c0_53, %c0_54, %c0_55, %c0_56] : memref<1x8x16x4xf32, #tpu.memory_space<vmem>>, vector<1x8x16x4xf32>
    %37 = vector.shape_cast %36 : vector<1x8x16x4xf32> to vector<8x16x4xf32>
    %38 = vector.shape_cast %35 : vector<128x4xf32> to vector<8x16x4xf32>
    %39 = arith.addf %37, %38 : vector<8x16x4xf32>
    %c0_57 = arith.constant 0 : index
    %c0_58 = arith.constant 0 : index
    %c0_59 = arith.constant 0 : index
    %c0_60 = arith.constant 0 : index
    %40 = vector.load %arg7[%c0_57, %c0_58, %c0_59, %c0_60] : memref<1x8x16x4xf32, #tpu.memory_space<vmem>>, vector<1x8x16x4xf32>
    %41 = vector.shape_cast %40 : vector<1x8x16x4xf32> to vector<8x16x4xf32>
    %42 = vector.shape_cast %39 : vector<8x16x4xf32> to vector<1x8x16x4xf32>
    tpu.vector_store %arg7[%c0_57, %c0_58, %c0_59, %c0_60], %42 {strides = array<i32>} : memref<1x8x16x4xf32, #tpu.memory_space<vmem>>, vector<1x8x16x4xf32>,
    return
  }
  func.func @transform_0(%arg0: i32, %arg1: i32) -> (i32, i32, i32, i32) {
    %c0_i32 = arith.constant 0 : i32
    %c0_i32_0 = arith.constant 0 : i32
    %c0_i32_1 = arith.constant 0 : i32
    return %arg0, %arg1, %c0_i32, %c0_i32_0 : i32, i32, i32, i32
  }
  func.func @transform_1(%arg0: i32, %arg1: i32) -> (i32, i32, i32, i32) {
    %c8_i32 = arith.constant 8 : i32
    %0 = arith.muli %arg1, %c8_i32 : i32
    %c1_i32 = arith.constant 1 : i32
    %1 = arith.subi %0, %c1_i32 : i32
    %c0_i32 = arith.constant 0 : i32
    %2 = arith.maxsi %1, %c0_i32 : i32
    %c0_i32_0 = arith.constant 0 : i32
    %c0_i32_1 = arith.constant 0 : i32
    %c0_i32_2 = arith.constant 0 : i32
    return %arg0, %2, %c0_i32_0, %c0_i32_1 : i32, i32, i32, i32
  }
  func.func @transform_2(%arg0: i32, %arg1: i32) -> (i32, i32, i32, i32) {
    %c1_i32 = arith.constant 1 : i32
    %0 = arith.addi %arg1, %c1_i32 : i32
    %c8_i32 = arith.constant 8 : i32
    %1 = arith.muli %0, %c8_i32 : i32
    %c15_i32 = arith.constant 15 : i32
    %2 = arith.minsi %1, %c15_i32 : i32
    %c0_i32 = arith.constant 0 : i32
    %c0_i32_0 = arith.constant 0 : i32
    %c0_i32_1 = arith.constant 0 : i32
    return %arg0, %2, %c0_i32, %c0_i32_0 : i32, i32, i32, i32
  }
  func.func @transform_3(%arg0: i32, %arg1: i32) -> (i32, i32) {
    %c0_i32 = arith.constant 0 : i32
    %c0_i32_0 = arith.constant 0 : i32
    %c0_i32_1 = arith.constant 0 : i32
    return %c0_i32, %c0_i32_0 : i32, i32
  }
  func.func @transform_4(%arg0: i32, %arg1: i32) -> (i32, i32) {
    %c0_i32 = arith.constant 0 : i32
    %c0_i32_0 = arith.constant 0 : i32
    %c0_i32_1 = arith.constant 0 : i32
    return %c0_i32, %c0_i32_0 : i32, i32
  }
  func.func @transform_5(%arg0: i32, %arg1: i32) -> (i32, i32, i32, i32) {
    %c0_i32 = arith.constant 0 : i32
    %c0_i32_0 = arith.constant 0 : i32
    %c0_i32_1 = arith.constant 0 : i32
    return %arg0, %arg1, %c0_i32, %c0_i32_0 : i32, i32, i32, i32
  }
}

</mosaic_0001>

<llo_original>
// kernel: tpu_custom_call.1
$region0: #{tpu_custom_call.1}
  #allocation0 [shape = 'u32[]', space=smem, size = 0x4, offset = 0x4, fixed_abs, tag = 'smem constant byte address 0x4 - core index']
  #allocation1 [shape = 'u32[144,128]{1,0:T(1,128)}', space=vmem, size = 0x12000, scoped, tag = 'internal scratch']
  #allocation2 [shape = 'f32[10,18,4]{2,1,0:T(8,128)}', space=vmem, size = 0x1e000, scoped, tag = 'scratch operand']
  %s0 = inlined_call_operand.vmem [shape: f32[2,16,16,4], index: 0, kind: input, shape index: {}]
  %s1 = inlined_call_operand.vmem [shape: f32[2,16,16,4], index: 1, kind: input, shape index: {}]
  %s2 = inlined_call_operand.vmem [shape: f32[2,16,16,4], index: 2, kind: input, shape index: {}]
  %s3 = inlined_call_operand.vmem [shape: f32[36,4], index: 3, kind: input, shape index: {}]
  %s4 = inlined_call_operand.vmem [shape: f32[1,4], index: 4, kind: input, shape index: {}]
  %s5 = inlined_call_operand.vmem [shape: f32[2,16,16,4], index: 5, kind: output, shape index: {}]
  %s6 = sld [smem:[#allocation0]]
  $region53: #{tpu_custom_call.1} parent=0
    _
  %s8 = ssub.s32 1, %s6
  %s9 = scalar_select 0, %s8, %s6
  loop: start=0, step=1, limit=6
  $region2: #{tpu_custom_call.1} parent=0 // loop_pre_header
    _
  $region3: #{tpu_custom_call.1} parent=0 // loop_header
    %s11 = sphi 0, %s15
    %p12 = scmp.ge.s32.totalorder %s11, 6
    %s18 = sphi 0, %s30
    %s19 = sphi 0, %s26
    %s20 = sphi 0, %s18
    %s21 = sphi 0, %s19
    %s22 = sphi 0, %s20
    %s23 = sphi 0, %s21
    %s35 = sphi 0, %s37
    %s38 = sphi 0, %s35
    %s39 = sphi 0, %s38
    %s55 = sphi 0, %s39
    %s71 = sphi 0, %s73
    %s74 = sphi 0, %s71
    %s75 = sphi 0, %s74
    %s91 = sphi 0, %s75
    %s107 = sphi 0, %s109
    %s110 = sphi 0, %s107
    %s111 = sphi 0, %s110
    %s127 = sphi 0, %s111
    %s131 = sphi 0, %s131
    %s133 = sphi 0, %s131
    %s134 = sphi 0, %s133
    %s148 = sphi 0, %s134
    %s152 = sphi 0, %s152
    %s154 = sphi 0, %s152
    %s155 = sphi 0, %s154
    %s169 = sphi 0, %s155
    %s177 = sphi 0, %s179
    %s180 = sphi 0, %s177
    %s181 = sphi 0, %s180
    %s197 = sphi 0, %s181
  $region4: #{tpu_custom_call.1} parent=0 // loop_header_branch
    %14 = sbr.rel (%p12) target = $region8
  $region5: #{tpu_custom_call.1} parent=0 // loop_body
    %s16 = ssub.s32 %s11, 1
    %s17 = ssub.s32 %s11, 2
    %s24 = sadd.s32 1, %s19
    %p25 = scmp.ge.s32.totalorder %s24, 2
    %s26 = scalar_select %p25, 0, %s24
    %s27 = sadd.s32 1, %s18
    %s28 = scalar_select %p25, %s27, %s18
    %p29 = scmp.ge.s32.totalorder %s28, 2
    %s30 = scalar_select %p29, 0, %s28
    %s31 = ssub.s32 %s18, %s30
    %s32 = ssub.s32 %s19, %s26
    %s33 = sor.u32 %s31, %s32
    %p34 = scmp.eq.s32.totalorder %s33, 0
    %s36 = sadd.s32 %s35, 1
    %s37 = scalar_select %p34, %s35, %s36
    %p40 = pneg %p34
    %p41 = scmp.eq.s32.totalorder %s11, 3
    %p42 = por %p40, %p41
    %p43 = scmp.ne.s32.totalorder %s35, %s38
    %p44 = scmp.eq.s32.totalorder %s11, 0
    %p45 = por %p43, %p44
    %p46 = scmp.ne.s32.totalorder %s35, %s38
    %p47 = scmp.eq.s32.totalorder %s16, 3
    %p48 = por %p46, %p47
    %p49 = scmp.ne.s32.totalorder %s38, %s39
    %p50 = scmp.eq.s32.totalorder %s16, 0
    %p51 = por %p49, %p50
    %p52 = scmp.ne.s32.totalorder %s38, %s39
    %p53 = scmp.eq.s32.totalorder %s17, 3
    %p54 = por %p52, %p53
    %p56 = scmp.ne.s32.totalorder %s39, %s55
    %p57 = scmp.eq.s32.totalorder %s17, 0
    %p58 = por %p56, %p57
    %s59 = smul.u32 %s19, 8
    %s60 = ssub.s32 %s59, 1
    %p61 = scmp.gt.s32.totalorder %s60, 0
    %s62 = scalar_select %p61, %s60, 0
    %s63 = smul.u32 %s26, 8
    %s64 = ssub.s32 %s63, 1
    %p65 = scmp.gt.s32.totalorder %s64, 0
    %s66 = scalar_select %p65, %s64, 0
    %s67 = ssub.s32 %s18, %s30
    %s68 = ssub.s32 %s62, %s66
    %s69 = sor.u32 %s67, %s68
    %p70 = scmp.eq.s32.totalorder %s69, 0
    %s72 = sadd.s32 %s71, 1
    %s73 = scalar_select %p70, %s71, %s72
    %p76 = pneg %p70
    %p77 = scmp.eq.s32.totalorder %s11, 3
    %p78 = por %p76, %p77
    %p79 = scmp.ne.s32.totalorder %s71, %s74
    %p80 = scmp.eq.s32.totalorder %s11, 0
    %p81 = por %p79, %p80
    %p82 = scmp.ne.s32.totalorder %s71, %s74
    %p83 = scmp.eq.s32.totalorder %s16, 3
    %p84 = por %p82, %p83
    %p85 = scmp.ne.s32.totalorder %s74, %s75
    %p86 = scmp.eq.s32.totalorder %s16, 0
    %p87 = por %p85, %p86
    %p88 = scmp.ne.s32.totalorder %s74, %s75
    %p89 = scmp.eq.s32.totalorder %s17, 3
    %p90 = por %p88, %p89
    %p92 = scmp.ne.s32.totalorder %s75, %s91
    %p93 = scmp.eq.s32.totalorder %s17, 0
    %p94 = por %p92, %p93
    %s95 = sadd.s32 %s19, 1
    %s96 = smul.u32 %s95, 8
    %p97 = scmp.lt.s32.totalorder %s96, 15
    %s98 = scalar_select %p97, %s96, 15
    %s99 = sadd.s32 %s26, 1
    %s100 = smul.u32 %s99, 8
    %p101 = scmp.lt.s32.totalorder %s100, 15
    %s102 = scalar_select %p101, %s100, 15
    %s103 = ssub.s32 %s18, %s30
    %s104 = ssub.s32 %s98, %s102
    %s105 = sor.u32 %s103, %s104
    %p106 = scmp.eq.s32.totalorder %s105, 0
    %s108 = sadd.s32 %s107, 1
    %s109 = scalar_select %p106, %s107, %s108
    %p112 = pneg %p106
    %p113 = scmp.eq.s32.totalorder %s11, 3
    %p114 = por %p112, %p113
    %p115 = scmp.ne.s32.totalorder %s107, %s110
    %p116 = scmp.eq.s32.totalorder %s11, 0
    %p117 = por %p115, %p116
    %p118 = scmp.ne.s32.totalorder %s107, %s110
    %p119 = scmp.eq.s32.totalorder %s16, 3
    %p120 = por %p118, %p119
    %p121 = scmp.ne.s32.totalorder %s110, %s111
    %p122 = scmp.eq.s32.totalorder %s16, 0
    %p123 = por %p121, %p122
    %p124 = scmp.ne.s32.totalorder %s110, %s111
    %p125 = scmp.eq.s32.totalorder %s17, 3
    %p126 = por %p124, %p125
    %p128 = scmp.ne.s32.totalorder %s111, %s127
    %p129 = scmp.eq.s32.totalorder %s17, 0
    %p130 = por %p128, %p129
    %s132 = sadd.s32 %s131, 1
    %p135 = scmp.eq.s32.totalorder %s11, 3
    %p136 = scmp.ne.s32.totalorder %s131, %s133
    %p137 = scmp.eq.s32.totalorder %s11, 0
    %p138 = por %p136, %p137
    %p139 = scmp.ne.s32.totalorder %s131, %s133
    %p140 = scmp.eq.s32.totalorder %s16, 3
    %p141 = por %p139, %p140
    %p142 = scmp.ne.s32.totalorder %s133, %s134
    %p143 = scmp.eq.s32.totalorder %s16, 0
    %p144 = por %p142, %p143
    %p145 = scmp.ne.s32.totalorder %s133, %s134
    %p146 = scmp.eq.s32.totalorder %s17, 3
    %p147 = por %p145, %p146
    %p149 = scmp.ne.s32.totalorder %s134, %s148
    %p150 = scmp.eq.s32.totalorder %s17, 0
    %p151 = por %p149, %p150
    %s153 = sadd.s32 %s152, 1
    %p156 = scmp.eq.s32.totalorder %s11, 3
    %p157 = scmp.ne.s32.totalorder %s152, %s154
    %p158 = scmp.eq.s32.totalorder %s11, 0
    %p159 = por %p157, %p158
    %p160 = scmp.ne.s32.totalorder %s152, %s154
    %p161 = scmp.eq.s32.totalorder %s16, 3
    %p162 = por %p160, %p161
    %p163 = scmp.ne.s32.totalorder %s154, %s155
    %p164 = scmp.eq.s32.totalorder %s16, 0
    %p165 = por %p163, %p164
    %p166 = scmp.ne.s32.totalorder %s154, %s155
    %p167 = scmp.eq.s32.totalorder %s17, 3
    %p168 = por %p166, %p167
    %p170 = scmp.ne.s32.totalorder %s155, %s169
    %p171 = scmp.eq.s32.totalorder %s17, 0
    %p172 = por %p170, %p171
    %s173 = ssub.s32 %s18, %s30
    %s174 = ssub.s32 %s19, %s26
    %s175 = sor.u32 %s173, %s174
    %p176 = scmp.eq.s32.totalorder %s175, 0
    %s178 = sadd.s32 %s177, 1
    %s179 = scalar_select %p176, %s177, %s178
    %p182 = pneg %p176
    %p183 = scmp.eq.s32.totalorder %s11, 3
    %p184 = por %p182, %p183
    %p185 = scmp.ne.s32.totalorder %s177, %s180
    %p186 = scmp.eq.s32.totalorder %s11, 0
    %p187 = por %p185, %p186
    %p188 = scmp.ne.s32.totalorder %s177, %s180
    %p189 = scmp.eq.s32.totalorder %s16, 3
    %p190 = por %p188, %p189
    %p191 = scmp.ne.s32.totalorder %s180, %s181
    %p192 = scmp.eq.s32.totalorder %s16, 0
    %p193 = por %p191, %p192
    %p194 = scmp.ne.s32.totalorder %s180, %s181
    %p195 = scmp.eq.s32.totalorder %s17, 3
    %p196 = por %p194, %p195
    %p198 = scmp.ne.s32.totalorder %s181, %s197
    %p199 = scmp.eq.s32.totalorder %s17, 0
    %p200 = por %p198, %p199
    %p201 = scmp.le.s32.totalorder 1, %s11
    %p202 = scmp.lt.s32.totalorder %s11, 5
    %p203 = pnand %p201, %p202
    %p204 = pneg %p203
    // Predicated region
    $region9: #{tpu_custom_call.1} parent=5 // pred_check
      _
    $region10: #{tpu_custom_call.1} parent=5 // pred_check_branch
      %206 = sbr.rel (%p203) target = $region12
    $region11: #{tpu_custom_call.1} parent=5 // pred_region
      %s207 = ssub.s32 %s11, 1
      // Predicated region
      $region13: #{tpu_custom_call.1} parent=11 // pred_check
        %p208 = pneg %p144
      $region14: #{tpu_custom_call.1} parent=11 // pred_check_branch
        %210 = sbr.rel (%p208) target = $region16
      $region15: #{tpu_custom_call.1} parent=11 // pred_region
        _
      $region16: #{tpu_custom_call.1} parent=11 // pred_fallthru
        _
      // Predicated region
      $region17: #{tpu_custom_call.1} parent=11 // pred_check
        %p211 = pneg %p165
      $region18: #{tpu_custom_call.1} parent=11 // pred_check_branch
        %213 = sbr.rel (%p211) target = $region20
      $region19: #{tpu_custom_call.1} parent=11 // pred_region
        _
      $region20: #{tpu_custom_call.1} parent=11 // pred_fallthru
        _
    $region12: #{tpu_custom_call.1} parent=5 // pred_fallthru
      _
    %p214 = scmp.lt.s32.totalorder %s11, 4
    // Predicated region
    $region21: #{tpu_custom_call.1} parent=5 // pred_check
      %p215 = pneg %p214
    $region22: #{tpu_custom_call.1} parent=5 // pred_check_branch
      %217 = sbr.rel (%p215) target = $region24
    $region23: #{tpu_custom_call.1} parent=5 // pred_region
      // Predicated region
      $region25: #{tpu_custom_call.1} parent=23 // pred_check
        %p218 = pneg %p45
      $region26: #{tpu_custom_call.1} parent=23 // pred_check_branch
        %220 = sbr.rel (%p218) target = $region28
      $region27: #{tpu_custom_call.1} parent=23 // pred_region
        %s221 = smul.u32 8, %s19
        %p222 = scmp.lt.s32.totalorder %s18, 1
        %s223 = scalar_select %p222, %s18, 1
        %p224 = scmp.lt.s32.totalorder %s221, 15
        %s225 = scalar_select %p224, %s221, 15
        %s226 = smul.addr %s225, 2
        %s227 = smul.addr %s223, 32
        %s228 = sadd.s32 %s226, %s227
        %s229 = smul.addr %s228, 8
        %s230 = scalar_lea.vmem %s0, %s229
        %s231 = smul.u32 8, %s19
      $region28: #{tpu_custom_call.1} parent=23 // pred_fallthru
        _
      // Predicated region
      $region29: #{tpu_custom_call.1} parent=23 // pred_check
        %p232 = pneg %p81
      $region30: #{tpu_custom_call.1} parent=23 // pred_check_branch
        %234 = sbr.rel (%p232) target = $region32
      $region31: #{tpu_custom_call.1} parent=23 // pred_region
        %s235 = smul.u32 %s19, 8
        %s236 = ssub.s32 %s235, 1
        %p237 = scmp.gt.s32.totalorder %s236, 0
        %s238 = scalar_select %p237, %s236, 0
        %p239 = scmp.lt.s32.totalorder %s18, 1
        %s240 = scalar_select %p239, %s18, 1
        %p241 = scmp.lt.s32.totalorder %s238, 15
        %s242 = scalar_select %p241, %s238, 15
        %s243 = smul.addr %s242, 2
        %s244 = smul.addr %s240, 32
        %s245 = sadd.s32 %s243, %s244
        %s246 = smul.addr %s245, 8
        %s247 = scalar_lea.vmem %s1, %s246
        %s248 = smul.u32 %s19, 8
        %s249 = ssub.s32 %s248, 1
        %p250 = scmp.gt.s32.totalorder %s249, 0
        %s251 = scalar_select %p250, %s249, 0
      $region32: #{tpu_custom_call.1} parent=23 // pred_fallthru
        _
      // Predicated region
      $region33: #{tpu_custom_call.1} parent=23 // pred_check
        %p252 = pneg %p117
      $region34: #{tpu_custom_call.1} parent=23 // pred_check_branch
        %254 = sbr.rel (%p252) target = $region36
      $region35: #{tpu_custom_call.1} parent=23 // pred_region
        %s255 = sadd.s32 %s19, 1
        %s256 = smul.u32 %s255, 8
        %p257 = scmp.lt.s32.totalorder %s256, 15
        %s258 = scalar_select %p257, %s256, 15
        %p259 = scmp.lt.s32.totalorder %s18, 1
        %s260 = scalar_select %p259, %s18, 1
        %p261 = scmp.lt.s32.totalorder %s258, 15
        %s262 = scalar_select %p261, %s258, 15
        %s263 = smul.addr %s262, 2
        %s264 = smul.addr %s260, 32
        %s265 = sadd.s32 %s263, %s264
        %s266 = smul.addr %s265, 8
        %s267 = scalar_lea.vmem %s2, %s266
        %s268 = sadd.s32 %s19, 1
        %s269 = smul.u32 %s268, 8
        %p270 = scmp.lt.s32.totalorder %s269, 15
        %s271 = scalar_select %p270, %s269, 15
      $region36: #{tpu_custom_call.1} parent=23 // pred_fallthru
        _
    $region24: #{tpu_custom_call.1} parent=5 // pred_fallthru
      _
    %p272 = scmp.le.s32.totalorder 1, %s11
    %p273 = scmp.lt.s32.totalorder %s11, 5
    %p274 = pnand %p272, %p273
    %p275 = pneg %p274
    // Predicated region
    $region37: #{tpu_custom_call.1} parent=5 // pred_check
      _
    $region38: #{tpu_custom_call.1} parent=5 // pred_check_branch
      %277 = sbr.rel (%p274) target = $region40
    $region39: #{tpu_custom_call.1} parent=5 // pred_region
      %s278 = ssub.s32 %s11, 1
      %s279 = smul.u32 8, %s21
      %p280 = scmp.lt.s32.totalorder %s20, 1
      %s281 = scalar_select %p280, %s20, 1
      %p282 = scmp.lt.s32.totalorder %s279, 15
      %s283 = scalar_select %p282, %s279, 15
      %s284 = smul.addr %s283, 2
      %s285 = smul.addr %s281, 32
      %s286 = sadd.s32 %s284, %s285
      %s287 = smul.addr %s286, 8
      %s288 = scalar_lea.vmem %s0, %s287
      %p289 = pneg %p51
      %p290 = pneg %p48
      %s291 = smul.u32 %s21, 8
      %s292 = ssub.s32 %s291, 1
      %p293 = scmp.gt.s32.totalorder %s292, 0
      %s294 = scalar_select %p293, %s292, 0
      %p295 = scmp.lt.s32.totalorder %s20, 1
      %s296 = scalar_select %p295, %s20, 1
      %p297 = scmp.lt.s32.totalorder %s294, 15
      %s298 = scalar_select %p297, %s294, 15
      %s299 = smul.addr %s298, 2
      %s300 = smul.addr %s296, 32
      %s301 = sadd.s32 %s299, %s300
      %s302 = smul.addr %s301, 8
      %s303 = scalar_lea.vmem %s1, %s302
      %p304 = pneg %p87
      %p305 = pneg %p84
      %s306 = sadd.s32 %s21, 1
      %s307 = smul.u32 %s306, 8
      %p308 = scmp.lt.s32.totalorder %s307, 15
      %s309 = scalar_select %p308, %s307, 15
      %p310 = scmp.lt.s32.totalorder %s20, 1
      %s311 = scalar_select %p310, %s20, 1
      %p312 = scmp.lt.s32.totalorder %s309, 15
      %s313 = scalar_select %p312, %s309, 15
      %s314 = smul.addr %s313, 2
      %s315 = smul.addr %s311, 32
      %s316 = sadd.s32 %s314, %s315
      %s317 = smul.addr %s316, 8
      %s318 = scalar_lea.vmem %s2, %s317
      %p319 = pneg %p123
      %p320 = pneg %p120
      %p321 = pneg %p144
      %p322 = pneg %p141
      %p323 = pneg %p165
      %p324 = pneg %p162
      %p325 = pneg %p193
      %p326 = pneg %p190
      %s327 = smul.u32 8, %s21
      %p328 = scmp.lt.s32.totalorder %s20, 1
      %s329 = scalar_select %p328, %s20, 1
      %p330 = scmp.lt.s32.totalorder %s327, 15
      %s331 = scalar_select %p330, %s327, 15
      %s332 = smul.addr %s331, 2
      %s333 = smul.addr %s329, 32
      %s334 = sadd.s32 %s332, %s333
      %s335 = smul.addr %s334, 8
      %s336 = scalar_lea.vmem %s5, %s335
      %s337 = smul.u32 8, %s21
      %p338 = scmp.lt.s32.totalorder %s20, 1
      %s339 = scalar_select %p338, %s20, 1
      %p340 = scmp.lt.s32.totalorder %s337, 15
      %s341 = scalar_select %p340, %s337, 15
      %s342 = smul.addr %s341, 2
      %s343 = smul.addr %s339, 32
      %s344 = sadd.s32 %s342, %s343
      %s345 = smul.addr %s344, 8
      %s346 = scalar_lea.vmem %s0, %s345
      %s347 = smul.u32 8, %s21
      %s348 = smul.u32 %s21, 8
      %s349 = ssub.s32 %s348, 1
      %p350 = scmp.gt.s32.totalorder %s349, 0
      %s351 = scalar_select %p350, %s349, 0
      %p352 = scmp.lt.s32.totalorder %s20, 1
      %s353 = scalar_select %p352, %s20, 1
      %p354 = scmp.lt.s32.totalorder %s351, 15
      %s355 = scalar_select %p354, %s351, 15
      %s356 = smul.addr %s355, 2
      %s357 = smul.addr %s353, 32
      %s358 = sadd.s32 %s356, %s357
      %s359 = smul.addr %s358, 8
      %s360 = scalar_lea.vmem %s1, %s359
      %s361 = smul.u32 %s21, 8
      %s362 = ssub.s32 %s361, 1
      %p363 = scmp.gt.s32.totalorder %s362, 0
      %s364 = scalar_select %p363, %s362, 0
      %s365 = sadd.s32 %s21, 1
      %s366 = smul.u32 %s365, 8
      %p367 = scmp.lt.s32.totalorder %s366, 15
      %s368 = scalar_select %p367, %s366, 15
      %p369 = scmp.lt.s32.totalorder %s20, 1
      %s370 = scalar_select %p369, %s20, 1
      %p371 = scmp.lt.s32.totalorder %s368, 15
      %s372 = scalar_select %p371, %s368, 15
      %s373 = smul.addr %s372, 2
      %s374 = smul.addr %s370, 32
      %s375 = sadd.s32 %s373, %s374
      %s376 = smul.addr %s375, 8
      %s377 = scalar_lea.vmem %s2, %s376
      %s378 = sadd.s32 %s21, 1
      %s379 = smul.u32 %s378, 8
      %p380 = scmp.lt.s32.totalorder %s379, 15
      %s381 = scalar_select %p380, %s379, 15
      %s382 = smul.u32 8, %s21
      %p383 = scmp.lt.s32.totalorder %s20, 1
      %s384 = scalar_select %p383, %s20, 1
      %p385 = scmp.lt.s32.totalorder %s382, 15
      %s386 = scalar_select %p385, %s382, 15
      %s387 = smul.addr %s386, 2
      %s388 = smul.addr %s384, 32
      %s389 = sadd.s32 %s387, %s388
      %s390 = smul.addr %s389, 8
      %s391 = scalar_lea.vmem %s5, %s390
      %s392 = smul.u32 8, %s21
      %vm393 = vcmask 31744
      %394 = vst.msk [vmem:[#allocation2] sm:$0xff] %vm393, 0.0
      %395 = vst.msk [vmem:[#allocation2 + $0x8] sm:$0xff] %vm393, 0.0
      %vm396 = vcmask 25600
      %397 = vst.msk [vmem:[#allocation2 + $0x10] sm:$0x3] %vm396, 0.0
      %398 = vst.msk [vmem:[#allocation2 + $0x18] sm:$0xff] %vm393, 0.0
      %399 = vst.msk [vmem:[#allocation2 + $0x20] sm:$0xff] %vm393, 0.0
      %400 = vst.msk [vmem:[#allocation2 + $0x28] sm:$0x3] %vm396, 0.0
      %401 = vst.msk [vmem:[#allocation2 + $0x30] sm:$0xff] %vm393, 0.0
      %402 = vst.msk [vmem:[#allocation2 + $0x38] sm:$0xff] %vm393, 0.0
      %403 = vst.msk [vmem:[#allocation2 + $0x40] sm:$0x3] %vm396, 0.0
      %404 = vst.msk [vmem:[#allocation2 + $0x48] sm:$0xff] %vm393, 0.0
      %405 = vst.msk [vmem:[#allocation2 + $0x50] sm:$0xff] %vm393, 0.0
      %406 = vst.msk [vmem:[#allocation2 + $0x58] sm:$0x3] %vm396, 0.0
      %407 = vst.msk [vmem:[#allocation2 + $0x60] sm:$0xff] %vm393, 0.0
      %408 = vst.msk [vmem:[#allocation2 + $0x68] sm:$0xff] %vm393, 0.0
      %409 = vst.msk [vmem:[#allocation2 + $0x70] sm:$0x3] %vm396, 0.0
      %410 = vst.msk [vmem:[#allocation2 + $0x78] sm:$0xff] %vm393, 0.0
      %411 = vst.msk [vmem:[#allocation2 + $0x80] sm:$0xff] %vm393, 0.0
      %412 = vst.msk [vmem:[#allocation2 + $0x88] sm:$0x3] %vm396, 0.0
      %413 = vst.msk [vmem:[#allocation2 + $0x90] sm:$0xff] %vm393, 0.0
      %414 = vst.msk [vmem:[#allocation2 + $0x98] sm:$0xff] %vm393, 0.0
      %415 = vst.msk [vmem:[#allocation2 + $0xa0] sm:$0x3] %vm396, 0.0
      %416 = vst.msk [vmem:[#allocation2 + $0xa8] sm:$0xff] %vm393, 0.0
      %417 = vst.msk [vmem:[#allocation2 + $0xb0] sm:$0xff] %vm393, 0.0
      %418 = vst.msk [vmem:[#allocation2 + $0xb8] sm:$0x3] %vm396, 0.0
      %419 = vst.msk [vmem:[#allocation2 + $0xc0] sm:$0xff] %vm393, 0.0
      %420 = vst.msk [vmem:[#allocation2 + $0xc8] sm:$0xff] %vm393, 0.0
      %421 = vst.msk [vmem:[#allocation2 + $0xd0] sm:$0x3] %vm396, 0.0
      %422 = vst.msk [vmem:[#allocation2 + $0xd8] sm:$0xff] %vm393, 0.0
      %423 = vst.msk [vmem:[#allocation2 + $0xe0] sm:$0xff] %vm393, 0.0
      %424 = vst.msk [vmem:[#allocation2 + $0xe8] sm:$0x3] %vm396, 0.0
      %v425 = vld [vmem:[%s346] sm:$0xff]
      %v426 = vld [vmem:[%s346 + $0x8] sm:$0xff]
      %v427 = vld [vmem:[%s346 + $0x10] sm:$0xff]
      %v428 = vld [vmem:[%s346 + $0x18] sm:$0xff]
      %v429 = vld [vmem:[%s346 + $0x20] sm:$0xff]
      %v430 = vld [vmem:[%s346 + $0x28] sm:$0xff]
      %v431 = vld [vmem:[%s346 + $0x30] sm:$0xff]
      %v432 = vld [vmem:[%s346 + $0x38] sm:$0xff]
      %v433 = vld [vmem:[%s346 + $0x40] sm:$0xff]
      %v434 = vld [vmem:[%s346 + $0x48] sm:$0xff]
      %v435 = vld [vmem:[%s346 + $0x50] sm:$0xff]
      %v436 = vld [vmem:[%s346 + $0x58] sm:$0xff]
      %v437 = vld [vmem:[%s346 + $0x60] sm:$0xff]
      %v438 = vld [vmem:[%s346 + $0x68] sm:$0xff]
      %v439 = vld [vmem:[%s346 + $0x70] sm:$0xff]
      %v440 = vld [vmem:[%s346 + $0x78] sm:$0xff]
      %s441 = scalar_lea.vmem [#allocation2], 24
      %442 = vst.msk [vmem:[%s441 + $0x1] sm:$0xff] %vm393, %v425
      %443 = vst.msk [vmem:[%s441 + $0x9] sm:$0xff] %vm393, %v426
      %444 = vst.msk [vmem:[%s441 + $0x19] sm:$0xff] %vm393, %v427
      %445 = vst.msk [vmem:[%s441 + $0x21] sm:$0xff] %vm393, %v428
      %446 = vst.msk [vmem:[%s441 + $0x31] sm:$0xff] %vm393, %v429
      %447 = vst.msk [vmem:[%s441 + $0x39] sm:$0xff] %vm393, %v430
      %448 = vst.msk [vmem:[%s441 + $0x49] sm:$0xff] %vm393, %v431
      %449 = vst.msk [vmem:[%s441 + $0x51] sm:$0xff] %vm393, %v432
      %450 = vst.msk [vmem:[%s441 + $0x61] sm:$0xff] %vm393, %v433
      %451 = vst.msk [vmem:[%s441 + $0x69] sm:$0xff] %vm393, %v434
      %452 = vst.msk [vmem:[%s441 + $0x79] sm:$0xff] %vm393, %v435
      %453 = vst.msk [vmem:[%s441 + $0x81] sm:$0xff] %vm393, %v436
      %454 = vst.msk [vmem:[%s441 + $0x91] sm:$0xff] %vm393, %v437
      %455 = vst.msk [vmem:[%s441 + $0x99] sm:$0xff] %vm393, %v438
      %456 = vst.msk [vmem:[%s441 + $0xa9] sm:$0xff] %vm393, %v439
      %457 = vst.msk [vmem:[%s441 + $0xb1] sm:$0xff] %vm393, %v440
      %p458 = scmp.gt.s32.totalorder %s21, 0
      %v459 = vld [vmem:[%s360] sm:$0xff]
      %v460 = vld [vmem:[%s360 + $0x8] sm:$0xff]
      %s461 = scalar_select %p458, 1, 0
      %v462 = vstv %s461
      %vm463 = vcmp.eq.s32.totalorder %v462, 1
      %v464 = vsel %vm463, %v459, 0.0
      %v465 = vsel %vm463, %v460, 0.0
      %466 = vst.msk [vmem:[#allocation2 + $0x1] sm:$0xff] %vm393, %v464
      %467 = vst.msk [vmem:[#allocation2 + $0x9] sm:$0xff] %vm393, %v465
      %p468 = scmp.lt.s32.totalorder %s21, 1
      %v469 = vld [vmem:[%s377] sm:$0xff]
      %v470 = vld [vmem:[%s377 + $0x8] sm:$0xff]
      %s471 = scalar_select %p468, 1, 0
      %v472 = vstv %s471
      %vm473 = vcmp.eq.s32.totalorder %v472, 1
      %v474 = vsel %vm473, %v469, 0.0
      %v475 = vsel %vm473, %v470, 0.0
      %s476 = scalar_lea.vmem [#allocation2], 216
      %477 = vst.msk [vmem:[%s476 + $0x1] sm:$0xff] %vm393, %v474
      %478 = vst.msk [vmem:[%s476 + $0x9] sm:$0xff] %vm393, %v475
      %v479 = vld [vmem:[#allocation2] sm:$0xff]
      %v480 = vld [vmem:[#allocation2 + $0x8] sm:$0xff]
      %v481 = vld [vmem:[#allocation2 + $0x18] sm:$0xff]
      %v482 = vld [vmem:[#allocation2 + $0x20] sm:$0xff]
      %v483 = vld [vmem:[#allocation2 + $0x30] sm:$0xff]
      %v484 = vld [vmem:[#allocation2 + $0x38] sm:$0xff]
      %v485 = vld [vmem:[#allocation2 + $0x48] sm:$0xff]
      %v486 = vld [vmem:[#allocation2 + $0x50] sm:$0xff]
      %v487 = vld [vmem:[#allocation2 + $0x60] sm:$0xff]
      %v488 = vld [vmem:[#allocation2 + $0x68] sm:$0xff]
      %v489 = vld [vmem:[#allocation2 + $0x78] sm:$0xff]
      %v490 = vld [vmem:[#allocation2 + $0x80] sm:$0xff]
      %v491 = vld [vmem:[#allocation2 + $0x90] sm:$0xff]
      %v492 = vld [vmem:[#allocation2 + $0x98] sm:$0xff]
      %v493 = vld [vmem:[#allocation2 + $0xa8] sm:$0xff]
      %v494 = vld [vmem:[#allocation2 + $0xb0] sm:$0xff]
      %v495 = vld [vmem:[#allocation2 + $0x1] sm:$0xff]
      %v496 = vld [vmem:[#allocation2 + $0x9] sm:$0xff]
      %v497 = vld [vmem:[#allocation2 + $0x19] sm:$0xff]
      %v498 = vld [vmem:[#allocation2 + $0x21] sm:$0xff]
      %v499 = vld [vmem:[#allocation2 + $0x31] sm:$0xff]
      %v500 = vld [vmem:[#allocation2 + $0x39] sm:$0xff]
      %v501 = vld [vmem:[#allocation2 + $0x49] sm:$0xff]
      %v502 = vld [vmem:[#allocation2 + $0x51] sm:$0xff]
      %v503 = vld [vmem:[#allocation2 + $0x61] sm:$0xff]
      %v504 = vld [vmem:[#allocation2 + $0x69] sm:$0xff]
      %v505 = vld [vmem:[#allocation2 + $0x79] sm:$0xff]
      %v506 = vld [vmem:[#allocation2 + $0x81] sm:$0xff]
      %v507 = vld [vmem:[#allocation2 + $0x91] sm:$0xff]
      %v508 = vld [vmem:[#allocation2 + $0x99] sm:$0xff]
      %v509 = vld [vmem:[#allocation2 + $0xa9] sm:$0xff]
      %v510 = vld [vmem:[#allocation2 + $0xb1] sm:$0xff]
      %v511 = vld [vmem:[#allocation2 + $0x2] sm:$0xff]
      %v512 = vld [vmem:[#allocation2 + $0xa] sm:$0xff]
      %v513 = vld [vmem:[#allocation2 + $0x1a] sm:$0xff]
      %v514 = vld [vmem:[#allocation2 + $0x22] sm:$0xff]
      %v515 = vld [vmem:[#allocation2 + $0x32] sm:$0xff]
      %v516 = vld [vmem:[#allocation2 + $0x3a] sm:$0xff]
      %v517 = vld [vmem:[#allocation2 + $0x4a] sm:$0xff]
      %v518 = vld [vmem:[#allocation2 + $0x52] sm:$0xff]
      %v519 = vld [vmem:[#allocation2 + $0x62] sm:$0xff]
      %v520 = vld [vmem:[#allocation2 + $0x6a] sm:$0xff]
      %v521 = vld [vmem:[#allocation2 + $0x7a] sm:$0xff]
      %v522 = vld [vmem:[#allocation2 + $0x82] sm:$0xff]
      %v523 = vld [vmem:[#allocation2 + $0x92] sm:$0xff]
      %v524 = vld [vmem:[#allocation2 + $0x9a] sm:$0xff]
      %v525 = vld [vmem:[#allocation2 + $0xaa] sm:$0xff]
      %v526 = vld [vmem:[#allocation2 + $0xb2] sm:$0xff]
      %v527 = vld [vmem:[%s441] sm:$0xff]
      %v528 = vld [vmem:[%s441 + $0x8] sm:$0xff]
      %v529 = vld [vmem:[%s441 + $0x18] sm:$0xff]
      %v530 = vld [vmem:[%s441 + $0x20] sm:$0xff]
      %v531 = vld [vmem:[%s441 + $0x30] sm:$0xff]
      %v532 = vld [vmem:[%s441 + $0x38] sm:$0xff]
      %v533 = vld [vmem:[%s441 + $0x48] sm:$0xff]
      %v534 = vld [vmem:[%s441 + $0x50] sm:$0xff]
      %v535 = vld [vmem:[%s441 + $0x60] sm:$0xff]
      %v536 = vld [vmem:[%s441 + $0x68] sm:$0xff]
      %v537 = vld [vmem:[%s441 + $0x78] sm:$0xff]
      %v538 = vld [vmem:[%s441 + $0x80] sm:$0xff]
      %v539 = vld [vmem:[%s441 + $0x90] sm:$0xff]
      %v540 = vld [vmem:[%s441 + $0x98] sm:$0xff]
      %v541 = vld [vmem:[%s441 + $0xa8] sm:$0xff]
      %v542 = vld [vmem:[%s441 + $0xb0] sm:$0xff]
      %v543 = vld [vmem:[%s441 + $0x1] sm:$0xff]
      %v544 = vld [vmem:[%s441 + $0x9] sm:$0xff]
      %v545 = vld [vmem:[%s441 + $0x19] sm:$0xff]
      %v546 = vld [vmem:[%s441 + $0x21] sm:$0xff]
      %v547 = vld [vmem:[%s441 + $0x31] sm:$0xff]
      %v548 = vld [vmem:[%s441 + $0x39] sm:$0xff]
      %v549 = vld [vmem:[%s441 + $0x49] sm:$0xff]
      %v550 = vld [vmem:[%s441 + $0x51] sm:$0xff]
      %v551 = vld [vmem:[%s441 + $0x61] sm:$0xff]
      %v552 = vld [vmem:[%s441 + $0x69] sm:$0xff]
      %v553 = vld [vmem:[%s441 + $0x79] sm:$0xff]
      %v554 = vld [vmem:[%s441 + $0x81] sm:$0xff]
      %v555 = vld [vmem:[%s441 + $0x91] sm:$0xff]
      %v556 = vld [vmem:[%s441 + $0x99] sm:$0xff]
      %v557 = vld [vmem:[%s441 + $0xa9] sm:$0xff]
      %v558 = vld [vmem:[%s441 + $0xb1] sm:$0xff]
      %v559 = vld [vmem:[%s441 + $0x2] sm:$0xff]
      %v560 = vld [vmem:[%s441 + $0xa] sm:$0xff]
      %v561 = vld [vmem:[%s441 + $0x1a] sm:$0xff]
      %v562 = vld [vmem:[%s441 + $0x22] sm:$0xff]
      %v563 = vld [vmem:[%s441 + $0x32] sm:$0xff]
      %v564 = vld [vmem:[%s441 + $0x3a] sm:$0xff]
      %v565 = vld [vmem:[%s441 + $0x4a] sm:$0xff]
      %v566 = vld [vmem:[%s441 + $0x52] sm:$0xff]
      %v567 = vld [vmem:[%s441 + $0x62] sm:$0xff]
      %v568 = vld [vmem:[%s441 + $0x6a] sm:$0xff]
      %v569 = vld [vmem:[%s441 + $0x7a] sm:$0xff]
      %v570 = vld [vmem:[%s441 + $0x82] sm:$0xff]
      %v571 = vld [vmem:[%s441 + $0x92] sm:$0xff]
      %v572 = vld [vmem:[%s441 + $0x9a] sm:$0xff]
      %v573 = vld [vmem:[%s441 + $0xaa] sm:$0xff]
      %v574 = vld [vmem:[%s441 + $0xb2] sm:$0xff]
      %s575 = scalar_lea.vmem [#allocation2], 48
      %v576 = vld [vmem:[%s575] sm:$0xff]
      %v577 = vld [vmem:[%s575 + $0x8] sm:$0xff]
      %v578 = vld [vmem:[%s575 + $0x18] sm:$0xff]
      %v579 = vld [vmem:[%s575 + $0x20] sm:$0xff]
      %v580 = vld [vmem:[%s575 + $0x30] sm:$0xff]
      %v581 = vld [vmem:[%s575 + $0x38] sm:$0xff]
      %v582 = vld [vmem:[%s575 + $0x48] sm:$0xff]
      %v583 = vld [vmem:[%s575 + $0x50] sm:$0xff]
      %v584 = vld [vmem:[%s575 + $0x60] sm:$0xff]
      %v585 = vld [vmem:[%s575 + $0x68] sm:$0xff]
      %v586 = vld [vmem:[%s575 + $0x78] sm:$0xff]
      %v587 = vld [vmem:[%s575 + $0x80] sm:$0xff]
      %v588 = vld [vmem:[%s575 + $0x90] sm:$0xff]
      %v589 = vld [vmem:[%s575 + $0x98] sm:$0xff]
      %v590 = vld [vmem:[%s575 + $0xa8] sm:$0xff]
      %v591 = vld [vmem:[%s575 + $0xb0] sm:$0xff]
      %v592 = vld [vmem:[%s575 + $0x1] sm:$0xff]
      %v593 = vld [vmem:[%s575 + $0x9] sm:$0xff]
      %v594 = vld [vmem:[%s575 + $0x19] sm:$0xff]
      %v595 = vld [vmem:[%s575 + $0x21] sm:$0xff]
      %v596 = vld [vmem:[%s575 + $0x31] sm:$0xff]
      %v597 = vld [vmem:[%s575 + $0x39] sm:$0xff]
      %v598 = vld [vmem:[%s575 + $0x49] sm:$0xff]
      %v599 = vld [vmem:[%s575 + $0x51] sm:$0xff]
      %v600 = vld [vmem:[%s575 + $0x61] sm:$0xff]
      %v601 = vld [vmem:[%s575 + $0x69] sm:$0xff]
      %v602 = vld [vmem:[%s575 + $0x79] sm:$0xff]
      %v603 = vld [vmem:[%s575 + $0x81] sm:$0xff]
      %v604 = vld [vmem:[%s575 + $0x91] sm:$0xff]
      %v605 = vld [vmem:[%s575 + $0x99] sm:$0xff]
      %v606 = vld [vmem:[%s575 + $0xa9] sm:$0xff]
      %v607 = vld [vmem:[%s575 + $0xb1] sm:$0xff]
      %v608 = vld [vmem:[%s575 + $0x2] sm:$0xff]
      %v609 = vld [vmem:[%s575 + $0xa] sm:$0xff]
      %v610 = vld [vmem:[%s575 + $0x1a] sm:$0xff]
      %v611 = vld [vmem:[%s575 + $0x22] sm:$0xff]
      %v612 = vld [vmem:[%s575 + $0x32] sm:$0xff]
      %v613 = vld [vmem:[%s575 + $0x3a] sm:$0xff]
      %v614 = vld [vmem:[%s575 + $0x4a] sm:$0xff]
      %v615 = vld [vmem:[%s575 + $0x52] sm:$0xff]
      %v616 = vld [vmem:[%s575 + $0x62] sm:$0xff]
      %v617 = vld [vmem:[%s575 + $0x6a] sm:$0xff]
      %v618 = vld [vmem:[%s575 + $0x7a] sm:$0xff]
      %v619 = vld [vmem:[%s575 + $0x82] sm:$0xff]
      %v620 = vld [vmem:[%s575 + $0x92] sm:$0xff]
      %v621 = vld [vmem:[%s575 + $0x9a] sm:$0xff]
      %v622 = vld [vmem:[%s575 + $0xaa] sm:$0xff]
      %v623 = vld [vmem:[%s575 + $0xb2] sm:$0xff]
      %640 = vrot.lane.b32.xlu0 %v495, 4
      %v641 = vpop.permute.xlu0 %640
      %642 = vrot.lane.b32.xlu0 %v496, 4
      %v643 = vpop.permute.xlu0 %642
      %644 = vrot.lane.b32.xlu0 %v497, 4
      %v645 = vpop.permute.xlu0 %644
      %646 = vrot.lane.b32.xlu0 %v498, 4
      %v647 = vpop.permute.xlu0 %646
      %648 = vrot.lane.b32.xlu0 %v499, 4
      %v649 = vpop.permute.xlu0 %648
      %650 = vrot.lane.b32.xlu0 %v500, 4
      %v651 = vpop.permute.xlu0 %650
      %652 = vrot.lane.b32.xlu0 %v501, 4
      %v653 = vpop.permute.xlu0 %652
      %654 = vrot.lane.b32.xlu0 %v502, 4
      %v655 = vpop.permute.xlu0 %654
      %656 = vrot.lane.b32.xlu0 %v503, 4
      %v657 = vpop.permute.xlu0 %656
      %658 = vrot.lane.b32.xlu0 %v504, 4
      %v659 = vpop.permute.xlu0 %658
      %660 = vrot.lane.b32.xlu0 %v505, 4
      %v661 = vpop.permute.xlu0 %660
      %662 = vrot.lane.b32.xlu0 %v506, 4
      %v663 = vpop.permute.xlu0 %662
      %664 = vrot.lane.b32.xlu0 %v507, 4
      %v665 = vpop.permute.xlu0 %664
      %666 = vrot.lane.b32.xlu0 %v508, 4
      %v667 = vpop.permute.xlu0 %666
      %668 = vrot.lane.b32.xlu0 %v509, 4
      %v669 = vpop.permute.xlu0 %668
      %670 = vrot.lane.b32.xlu0 %v510, 4
      %v671 = vpop.permute.xlu0 %670
      %704 = vrot.lane.b32.xlu0 %v511, 8
      %v705 = vpop.permute.xlu0 %704
      %706 = vrot.lane.b32.xlu0 %v512, 8
      %v707 = vpop.permute.xlu0 %706
      %708 = vrot.lane.b32.xlu0 %v513, 8
      %v709 = vpop.permute.xlu0 %708
      %710 = vrot.lane.b32.xlu0 %v514, 8
      %v711 = vpop.permute.xlu0 %710
      %712 = vrot.lane.b32.xlu0 %v515, 8
      %v713 = vpop.permute.xlu0 %712
      %714 = vrot.lane.b32.xlu0 %v516, 8
      %v715 = vpop.permute.xlu0 %714
      %716 = vrot.lane.b32.xlu0 %v517, 8
      %v717 = vpop.permute.xlu0 %716
      %718 = vrot.lane.b32.xlu0 %v518, 8
      %v719 = vpop.permute.xlu0 %718
      %720 = vrot.lane.b32.xlu0 %v519, 8
      %v721 = vpop.permute.xlu0 %720
      %722 = vrot.lane.b32.xlu0 %v520, 8
      %v723 = vpop.permute.xlu0 %722
      %724 = vrot.lane.b32.xlu0 %v521, 8
      %v725 = vpop.permute.xlu0 %724
      %726 = vrot.lane.b32.xlu0 %v522, 8
      %v727 = vpop.permute.xlu0 %726
      %728 = vrot.lane.b32.xlu0 %v523, 8
      %v729 = vpop.permute.xlu0 %728
      %730 = vrot.lane.b32.xlu0 %v524, 8
      %v731 = vpop.permute.xlu0 %730
      %732 = vrot.lane.b32.xlu0 %v525, 8
      %v733 = vpop.permute.xlu0 %732
      %734 = vrot.lane.b32.xlu0 %v526, 8
      %v735 = vpop.permute.xlu0 %734
      %768 = vrot.lane.b32.xlu0 %v527, 12
      %v769 = vpop.permute.xlu0 %768
      %770 = vrot.lane.b32.xlu0 %v528, 12
      %v771 = vpop.permute.xlu0 %770
      %772 = vrot.lane.b32.xlu0 %v529, 12
      %v773 = vpop.permute.xlu0 %772
      %774 = vrot.lane.b32.xlu0 %v530, 12
      %v775 = vpop.permute.xlu0 %774
      %776 = vrot.lane.b32.xlu0 %v531, 12
      %v777 = vpop.permute.xlu0 %776
      %778 = vrot.lane.b32.xlu0 %v532, 12
      %v779 = vpop.permute.xlu0 %778
      %780 = vrot.lane.b32.xlu0 %v533, 12
      %v781 = vpop.permute.xlu0 %780
      %782 = vrot.lane.b32.xlu0 %v534, 12
      %v783 = vpop.permute.xlu0 %782
      %784 = vrot.lane.b32.xlu0 %v535, 12
      %v785 = vpop.permute.xlu0 %784
      %786 = vrot.lane.b32.xlu0 %v536, 12
      %v787 = vpop.permute.xlu0 %786
      %788 = vrot.lane.b32.xlu0 %v537, 12
      %v789 = vpop.permute.xlu0 %788
      %790 = vrot.lane.b32.xlu0 %v538, 12
      %v791 = vpop.permute.xlu0 %790
      %792 = vrot.lane.b32.xlu0 %v539, 12
      %v793 = vpop.permute.xlu0 %792
      %794 = vrot.lane.b32.xlu0 %v540, 12
      %v795 = vpop.permute.xlu0 %794
      %796 = vrot.lane.b32.xlu0 %v541, 12
      %v797 = vpop.permute.xlu0 %796
      %798 = vrot.lane.b32.xlu0 %v542, 12
      %v799 = vpop.permute.xlu0 %798
      %832 = vrot.lane.b32.xlu0 %v543, 16
      %v833 = vpop.permute.xlu0 %832
      %834 = vrot.lane.b32.xlu0 %v544, 16
      %v835 = vpop.permute.xlu0 %834
      %836 = vrot.lane.b32.xlu0 %v545, 16
      %v837 = vpop.permute.xlu0 %836
      %838 = vrot.lane.b32.xlu0 %v546, 16
      %v839 = vpop.permute.xlu0 %838
      %840 = vrot.lane.b32.xlu0 %v547, 16
      %v841 = vpop.permute.xlu0 %840
      %842 = vrot.lane.b32.xlu0 %v548, 16
      %v843 = vpop.permute.xlu0 %842
      %844 = vrot.lane.b32.xlu0 %v549, 16
      %v845 = vpop.permute.xlu0 %844
      %846 = vrot.lane.b32.xlu0 %v550, 16
      %v847 = vpop.permute.xlu0 %846
      %848 = vrot.lane.b32.xlu0 %v551, 16
      %v849 = vpop.permute.xlu0 %848
      %850 = vrot.lane.b32.xlu0 %v552, 16
      %v851 = vpop.permute.xlu0 %850
      %852 = vrot.lane.b32.xlu0 %v553, 16
      %v853 = vpop.permute.xlu0 %852
      %854 = vrot.lane.b32.xlu0 %v554, 16
      %v855 = vpop.permute.xlu0 %854
      %856 = vrot.lane.b32.xlu0 %v555, 16
      %v857 = vpop.permute.xlu0 %856
      %858 = vrot.lane.b32.xlu0 %v556, 16
      %v859 = vpop.permute.xlu0 %858
      %860 = vrot.lane.b32.xlu0 %v557, 16
      %v861 = vpop.permute.xlu0 %860
      %862 = vrot.lane.b32.xlu0 %v558, 16
      %v863 = vpop.permute.xlu0 %862
      %896 = vrot.lane.b32.xlu0 %v559, 20
      %v897 = vpop.permute.xlu0 %896
      %898 = vrot.lane.b32.xlu0 %v560, 20
      %v899 = vpop.permute.xlu0 %898
      %900 = vrot.lane.b32.xlu0 %v561, 20
      %v901 = vpop.permute.xlu0 %900
      %902 = vrot.lane.b32.xlu0 %v562, 20
      %v903 = vpop.permute.xlu0 %902
      %904 = vrot.lane.b32.xlu0 %v563, 20
      %v905 = vpop.permute.xlu0 %904
      %906 = vrot.lane.b32.xlu0 %v564, 20
      %v907 = vpop.permute.xlu0 %906
      %908 = vrot.lane.b32.xlu0 %v565, 20
      %v909 = vpop.permute.xlu0 %908
      %910 = vrot.lane.b32.xlu0 %v566, 20
      %v911 = vpop.permute.xlu0 %910
      %912 = vrot.lane.b32.xlu0 %v567, 20
      %v913 = vpop.permute.xlu0 %912
      %914 = vrot.lane.b32.xlu0 %v568, 20
      %v915 = vpop.permute.xlu0 %914
      %916 = vrot.lane.b32.xlu0 %v569, 20
      %v917 = vpop.permute.xlu0 %916
      %918 = vrot.lane.b32.xlu0 %v570, 20
      %v919 = vpop.permute.xlu0 %918
      %920 = vrot.lane.b32.xlu0 %v571, 20
      %v921 = vpop.permute.xlu0 %920
      %922 = vrot.lane.b32.xlu0 %v572, 20
      %v923 = vpop.permute.xlu0 %922
      %924 = vrot.lane.b32.xlu0 %v573, 20
      %v925 = vpop.permute.xlu0 %924
      %926 = vrot.lane.b32.xlu0 %v574, 20
      %v927 = vpop.permute.xlu0 %926
      %960 = vrot.lane.b32.xlu0 %v576, 24
      %v961 = vpop.permute.xlu0 %960
      %962 = vrot.lane.b32.xlu0 %v577, 24
      %v963 = vpop.permute.xlu0 %962
      %964 = vrot.lane.b32.xlu0 %v578, 24
      %v965 = vpop.permute.xlu0 %964
      %966 = vrot.lane.b32.xlu0 %v579, 24
      %v967 = vpop.permute.xlu0 %966
      %968 = vrot.lane.b32.xlu0 %v580, 24
      %v969 = vpop.permute.xlu0 %968
      %970 = vrot.lane.b32.xlu0 %v581, 24
      %v971 = vpop.permute.xlu0 %970
      %972 = vrot.lane.b32.xlu0 %v582, 24
      %v973 = vpop.permute.xlu0 %972
      %974 = vrot.lane.b32.xlu0 %v583, 24
      %v975 = vpop.permute.xlu0 %974
      %976 = vrot.lane.b32.xlu0 %v584, 24
      %v977 = vpop.permute.xlu0 %976
      %978 = vrot.lane.b32.xlu0 %v585, 24
      %v979 = vpop.permute.xlu0 %978
      %980 = vrot.lane.b32.xlu0 %v586, 24
      %v981 = vpop.permute.xlu0 %980
      %982 = vrot.lane.b32.xlu0 %v587, 24
      %v983 = vpop.permute.xlu0 %982
      %984 = vrot.lane.b32.xlu0 %v588, 24
      %v985 = vpop.permute.xlu0 %984
      %986 = vrot.lane.b32.xlu0 %v589, 24
      %v987 = vpop.permute.xlu0 %986
      %988 = vrot.lane.b32.xlu0 %v590, 24
      %v989 = vpop.permute.xlu0 %988
      %990 = vrot.lane.b32.xlu0 %v591, 24
      %v991 = vpop.permute.xlu0 %990
      %1024 = vrot.lane.b32.xlu0 %v592, 28
      %v1025 = vpop.permute.xlu0 %1024
      %1026 = vrot.lane.b32.xlu0 %v593, 28
      %v1027 = vpop.permute.xlu0 %1026
      %1028 = vrot.lane.b32.xlu0 %v594, 28
      %v1029 = vpop.permute.xlu0 %1028
      %1030 = vrot.lane.b32.xlu0 %v595, 28
      %v1031 = vpop.permute.xlu0 %1030
      %1032 = vrot.lane.b32.xlu0 %v596, 28
      %v1033 = vpop.permute.xlu0 %1032
      %1034 = vrot.lane.b32.xlu0 %v597, 28
      %v1035 = vpop.permute.xlu0 %1034
      %1036 = vrot.lane.b32.xlu0 %v598, 28
      %v1037 = vpop.permute.xlu0 %1036
      %1038 = vrot.lane.b32.xlu0 %v599, 28
      %v1039 = vpop.permute.xlu0 %1038
      %1040 = vrot.lane.b32.xlu0 %v600, 28
      %v1041 = vpop.permute.xlu0 %1040
      %1042 = vrot.lane.b32.xlu0 %v601, 28
      %v1043 = vpop.permute.xlu0 %1042
      %1044 = vrot.lane.b32.xlu0 %v602, 28
      %v1045 = vpop.permute.xlu0 %1044
      %1046 = vrot.lane.b32.xlu0 %v603, 28
      %v1047 = vpop.permute.xlu0 %1046
      %1048 = vrot.lane.b32.xlu0 %v604, 28
      %v1049 = vpop.permute.xlu0 %1048
      %1050 = vrot.lane.b32.xlu0 %v605, 28
      %v1051 = vpop.permute.xlu0 %1050
      %1052 = vrot.lane.b32.xlu0 %v606, 28
      %v1053 = vpop.permute.xlu0 %1052
      %1054 = vrot.lane.b32.xlu0 %v607, 28
      %v1055 = vpop.permute.xlu0 %1054
      %1088 = vrot.lane.b32.xlu0 %v608, 32
      %v1089 = vpop.permute.xlu0 %1088
      %1090 = vrot.lane.b32.xlu0 %v609, 32
      %v1091 = vpop.permute.xlu0 %1090
      %1092 = vrot.lane.b32.xlu0 %v610, 32
      %v1093 = vpop.permute.xlu0 %1092
      %1094 = vrot.lane.b32.xlu0 %v611, 32
      %v1095 = vpop.permute.xlu0 %1094
      %1096 = vrot.lane.b32.xlu0 %v612, 32
      %v1097 = vpop.permute.xlu0 %1096
      %1098 = vrot.lane.b32.xlu0 %v613, 32
      %v1099 = vpop.permute.xlu0 %1098
      %1100 = vrot.lane.b32.xlu0 %v614, 32
      %v1101 = vpop.permute.xlu0 %1100
      %1102 = vrot.lane.b32.xlu0 %v615, 32
      %v1103 = vpop.permute.xlu0 %1102
      %1104 = vrot.lane.b32.xlu0 %v616, 32
      %v1105 = vpop.permute.xlu0 %1104
      %1106 = vrot.lane.b32.xlu0 %v617, 32
      %v1107 = vpop.permute.xlu0 %1106
      %1108 = vrot.lane.b32.xlu0 %v618, 32
      %v1109 = vpop.permute.xlu0 %1108
      %1110 = vrot.lane.b32.xlu0 %v619, 32
      %v1111 = vpop.permute.xlu0 %1110
      %1112 = vrot.lane.b32.xlu0 %v620, 32
      %v1113 = vpop.permute.xlu0 %1112
      %1114 = vrot.lane.b32.xlu0 %v621, 32
      %v1115 = vpop.permute.xlu0 %1114
      %1116 = vrot.lane.b32.xlu0 %v622, 32
      %v1117 = vpop.permute.xlu0 %1116
      %1118 = vrot.lane.b32.xlu0 %v623, 32
      %v1119 = vpop.permute.xlu0 %1118
      %v1136 = vsel %vm393, %v479, %v641
      %v1137 = vsel %vm393, %v480, %v643
      %v1138 = vsel %vm393, %v481, %v645
      %v1139 = vsel %vm393, %v482, %v647
      %v1140 = vsel %vm393, %v483, %v649
      %v1141 = vsel %vm393, %v484, %v651
      %v1142 = vsel %vm393, %v485, %v653
      %v1143 = vsel %vm393, %v486, %v655
      %v1144 = vsel %vm393, %v487, %v657
      %v1145 = vsel %vm393, %v488, %v659
      %v1146 = vsel %vm393, %v489, %v661
      %v1147 = vsel %vm393, %v490, %v663
      %v1148 = vsel %vm393, %v491, %v665
      %v1149 = vsel %vm393, %v492, %v667
      %v1150 = vsel %vm393, %v493, %v669
      %v1151 = vsel %vm393, %v494, %v671
      %vm1152 = vcmask 64512
      %v1153 = vsel %vm1152, %v1136, %v705
      %v1154 = vsel %vm1152, %v1137, %v707
      %v1155 = vsel %vm1152, %v1138, %v709
      %v1156 = vsel %vm1152, %v1139, %v711
      %v1157 = vsel %vm1152, %v1140, %v713
      %v1158 = vsel %vm1152, %v1141, %v715
      %v1159 = vsel %vm1152, %v1142, %v717
      %v1160 = vsel %vm1152, %v1143, %v719
      %v1161 = vsel %vm1152, %v1144, %v721
      %v1162 = vsel %vm1152, %v1145, %v723
      %v1163 = vsel %vm1152, %v1146, %v725
      %v1164 = vsel %vm1152, %v1147, %v727
      %v1165 = vsel %vm1152, %v1148, %v729
      %v1166 = vsel %vm1152, %v1149, %v731
      %v1167 = vsel %vm1152, %v1150, %v733
      %v1168 = vsel %vm1152, %v1151, %v735
      %vm1169 = vcmask 97280
      %v1170 = vsel %vm1169, %v1153, %v769
      %v1171 = vsel %vm1169, %v1154, %v771
      %v1172 = vsel %vm1169, %v1155, %v773
      %v1173 = vsel %vm1169, %v1156, %v775
      %v1174 = vsel %vm1169, %v1157, %v777
      %v1175 = vsel %vm1169, %v1158, %v779
      %v1176 = vsel %vm1169, %v1159, %v781
      %v1177 = vsel %vm1169, %v1160, %v783
      %v1178 = vsel %vm1169, %v1161, %v785
      %v1179 = vsel %vm1169, %v1162, %v787
      %v1180 = vsel %vm1169, %v1163, %v789
      %v1181 = vsel %vm1169, %v1164, %v791
      %v1182 = vsel %vm1169, %v1165, %v793
      %v1183 = vsel %vm1169, %v1166, %v795
      %v1184 = vsel %vm1169, %v1167, %v797
      %v1185 = vsel %vm1169, %v1168, %v799
      %vm1186 = vcmask 130048
      %v1187 = vsel %vm1186, %v1170, %v833
      %v1188 = vsel %vm1186, %v1171, %v835
      %v1189 = vsel %vm1186, %v1172, %v837
      %v1190 = vsel %vm1186, %v1173, %v839
      %v1191 = vsel %vm1186, %v1174, %v841
      %v1192 = vsel %vm1186, %v1175, %v843
      %v1193 = vsel %vm1186, %v1176, %v845
      %v1194 = vsel %vm1186, %v1177, %v847
      %v1195 = vsel %vm1186, %v1178, %v849
      %v1196 = vsel %vm1186, %v1179, %v851
      %v1197 = vsel %vm1186, %v1180, %v853
      %v1198 = vsel %vm1186, %v1181, %v855
      %v1199 = vsel %vm1186, %v1182, %v857
      %v1200 = vsel %vm1186, %v1183, %v859
      %v1201 = vsel %vm1186, %v1184, %v861
      %v1202 = vsel %vm1186, %v1185, %v863
      %vm1203 = vcmask 162816
      %v1204 = vsel %vm1203, %v1187, %v897
      %v1205 = vsel %vm1203, %v1188, %v899
      %v1206 = vsel %vm1203, %v1189, %v901
      %v1207 = vsel %vm1203, %v1190, %v903
      %v1208 = vsel %vm1203, %v1191, %v905
      %v1209 = vsel %vm1203, %v1192, %v907
      %v1210 = vsel %vm1203, %v1193, %v909
      %v1211 = vsel %vm1203, %v1194, %v911
      %v1212 = vsel %vm1203, %v1195, %v913
      %v1213 = vsel %vm1203, %v1196, %v915
      %v1214 = vsel %vm1203, %v1197, %v917
      %v1215 = vsel %vm1203, %v1198, %v919
      %v1216 = vsel %vm1203, %v1199, %v921
      %v1217 = vsel %vm1203, %v1200, %v923
      %v1218 = vsel %vm1203, %v1201, %v925
      %v1219 = vsel %vm1203, %v1202, %v927
      %vm1220 = vcmask 195584
      %v1221 = vsel %vm1220, %v1204, %v961
      %v1222 = vsel %vm1220, %v1205, %v963
      %v1223 = vsel %vm1220, %v1206, %v965
      %v1224 = vsel %vm1220, %v1207, %v967
      %v1225 = vsel %vm1220, %v1208, %v969
      %v1226 = vsel %vm1220, %v1209, %v971
      %v1227 = vsel %vm1220, %v1210, %v973
      %v1228 = vsel %vm1220, %v1211, %v975
      %v1229 = vsel %vm1220, %v1212, %v977
      %v1230 = vsel %vm1220, %v1213, %v979
      %v1231 = vsel %vm1220, %v1214, %v981
      %v1232 = vsel %vm1220, %v1215, %v983
      %v1233 = vsel %vm1220, %v1216, %v985
      %v1234 = vsel %vm1220, %v1217, %v987
      %v1235 = vsel %vm1220, %v1218, %v989
      %v1236 = vsel %vm1220, %v1219, %v991
      %vm1237 = vcmask 228352
      %v1238 = vsel %vm1237, %v1221, %v1025
      %v1239 = vsel %vm1237, %v1222, %v1027
      %v1240 = vsel %vm1237, %v1223, %v1029
      %v1241 = vsel %vm1237, %v1224, %v1031
      %v1242 = vsel %vm1237, %v1225, %v1033
      %v1243 = vsel %vm1237, %v1226, %v1035
      %v1244 = vsel %vm1237, %v1227, %v1037
      %v1245 = vsel %vm1237, %v1228, %v1039
      %v1246 = vsel %vm1237, %v1229, %v1041
      %v1247 = vsel %vm1237, %v1230, %v1043
      %v1248 = vsel %vm1237, %v1231, %v1045
      %v1249 = vsel %vm1237, %v1232, %v1047
      %v1250 = vsel %vm1237, %v1233, %v1049
      %v1251 = vsel %vm1237, %v1234, %v1051
      %v1252 = vsel %vm1237, %v1235, %v1053
      %v1253 = vsel %vm1237, %v1236, %v1055
      %vm1254 = vcmask 261120
      %v1255 = vsel %vm1254, %v1238, %v1089
      %v1256 = vsel %vm1254, %v1239, %v1091
      %v1257 = vsel %vm1254, %v1240, %v1093
      %v1258 = vsel %vm1254, %v1241, %v1095
      %v1259 = vsel %vm1254, %v1242, %v1097
      %v1260 = vsel %vm1254, %v1243, %v1099
      %v1261 = vsel %vm1254, %v1244, %v1101
      %v1262 = vsel %vm1254, %v1245, %v1103
      %v1263 = vsel %vm1254, %v1246, %v1105
      %v1264 = vsel %vm1254, %v1247, %v1107
      %v1265 = vsel %vm1254, %v1248, %v1109
      %v1266 = vsel %vm1254, %v1249, %v1111
      %v1267 = vsel %vm1254, %v1250, %v1113
      %v1268 = vsel %vm1254, %v1251, %v1115
      %v1269 = vsel %vm1254, %v1252, %v1117
      %v1270 = vsel %vm1254, %v1253, %v1119
      %v1271 = vld [vmem:[%s3] sm:$0xff]
      %v1272 = vld [vmem:[%s3 + $0x8] sm:$0xff]
      %v1273 = vld [vmem:[%s3 + $0x10] sm:$0xff]
      %v1274 = vld [vmem:[%s3 + $0x18] sm:$0xff]
      %v1275 = vld [vmem:[%s3 + $0x20] sm:$0xf]
      %v1276 = vld [vmem:[%s4] sm:$0x1]
      %v1278 = vlaneseq
      %v1279 = vshrl.u32 %v1278, 7
      %v1280 = vsub.s32 0, %v1279
      %v1281 = vrot.slane %v1276, %v1280
      %vm1283 = vcmask 293888
      %v1285 = vsel %vm1283, %v1255, 0
      %v1288 = vsel %vm1283, %v1256, 0
      %v1291 = vsel %vm1283, %v1257, 0
      %v1294 = vsel %vm1283, %v1258, 0
      %v1297 = vsel %vm1283, %v1259, 0
      %v1300 = vsel %vm1283, %v1260, 0
      %v1303 = vsel %vm1283, %v1261, 0
      %v1306 = vsel %vm1283, %v1262, 0
      %v1309 = vsel %vm1283, %v1263, 0
      %v1312 = vsel %vm1283, %v1264, 0
      %v1315 = vsel %vm1283, %v1265, 0
      %v1318 = vsel %vm1283, %v1266, 0
      %v1321 = vsel %vm1283, %v1267, 0
      %v1324 = vsel %vm1283, %v1268, 0
      %v1327 = vsel %vm1283, %v1269, 0
      %v1330 = vsel %vm1283, %v1270, 0
      %vm1332 = vcmask 1043456
      %v1334 = vsel %vm1332, %v1275, 0
      %1336 = vmatprep.subr.mxu0 0.0
      %1337 = vmatpush1.msra.mxu0 %v1271
      %1338 = vmatprep.subr.mxu0 0.0
      %1339 = vmatpush1.msra.mxu0 %v1272
      %1340 = vmatprep.subr.mxu0 0.0
      %1341 = vmatpush1.msra.mxu0 %v1273
      %1342 = vmatprep.subr.mxu0 0.0
      %1343 = vmatpush1.msra.mxu0 %v1274
      %1344 = vmatprep.subr.mxu0 0.0
      %1345 = vmatpush1.msra.mxu0 %v1334
      %1346 = vmatprep.subr.mxu0 0.0
      %1347 = vmatpush1.msra.mxu0 0.0
      %1348 = vmatprep.subr.mxu0 0.0
      %1349 = vmatpush1.msra.mxu0 0.0
      %1350 = vmatprep.subr.mxu0 0.0
      %1351 = vmatpush1.msra.mxu0 0.0
      %1352 = vmatprep.subr.mxu0 0.0
      %1353 = vmatpush1.msra.mxu0 0.0
      %1354 = vmatprep.subr.mxu0 0.0
      %1355 = vmatpush1.msra.mxu0 0.0
      %1356 = vmatprep.subr.mxu0 0.0
      %1357 = vmatpush1.msra.mxu0 0.0
      %1358 = vmatprep.subr.mxu0 0.0
      %1359 = vmatpush1.msra.mxu0 0.0
      %1360 = vmatprep.subr.mxu0 0.0
      %1361 = vmatpush1.msra.mxu0 0.0
      %1362 = vmatprep.subr.mxu0 0.0
      %1363 = vmatpush1.msra.mxu0 0.0
      %1364 = vmatprep.subr.mxu0 0.0
      %1365 = vmatpush1.msra.mxu0 0.0
      %1366 = vmatprep.subr.mxu0 0.0
      %1367 = vmatpush1.msra.mxu0 0.0
      %1368 = vmatprep.subr.mxu0 0.0
      %1369 = vmatpush1.msra.mxu0 0.0
      %1370 = vmatprep.subr.mxu0 0.0
      %1371 = vmatpush1.msra.mxu0 0.0
      %1372 = vmatprep.subr.mxu0 0.0
      %1373 = vmatpush1.msra.mxu0 0.0
      %1374 = vmatprep.subr.mxu0 0.0
      %1375 = vmatpush1.msra.mxu0 0.0
      %1376 = vmatprep.subr.mxu0 0.0
      %1377 = vmatpush1.msra.mxu0 0.0
      %1378 = vmatprep.subr.mxu0 0.0
      %1379 = vmatpush1.msra.mxu0 0.0
      %1380 = vmatprep.subr.mxu0 0.0
      %1381 = vmatpush1.msra.mxu0 0.0
      %1382 = vmatprep.subr.mxu0 0.0
      %1383 = vmatpush1.msra.mxu0 0.0
      %1384 = vmatprep.subr.mxu0 0.0
      %1385 = vmatpush1.msra.mxu0 0.0
      %1386 = vmatprep.subr.mxu0 0.0
      %1387 = vmatpush1.msra.mxu0 0.0
      %1388 = vmatprep.subr.mxu0 0.0
      %1389 = vmatpush1.msra.mxu0 0.0
      %1390 = vmatprep.subr.mxu0 0.0
      %1391 = vmatpush1.msra.mxu0 0.0
      %1392 = vmatprep.subr.mxu0 0.0
      %1393 = vmatpush1.msra.mxu0 0.0
      %1394 = vmatprep.subr.mxu0 0.0
      %1395 = vmatpush1.msra.mxu0 0.0
      %1396 = vmatprep.subr.mxu0 0.0
      %1397 = vmatpush1.msra.mxu0 0.0
      %1398 = vmatprep.subr.mxu0 0.0
      %1399 = vmatpush1.msra.mxu0 0.0
      %1400 = vmatprep.mubr.f32.mxu0 0.0
      %1401 = vmatmul.mubr.f32.gmra.mrb[0].mxu0 %v1285
      %v1402 = vpop.f32.mrb[0].mxu0
      %v1403 = vadd.f32 %v1281, %v1402
      %v1404 = vpop.f32.mrb[0].mxu0
      %1405 = vmatprep.mubr.f32.mxu0 0.0
      %1406 = vmatmul.mubr.f32.gmra.mrb[0].mxu0 %v1288
      %v1407 = vpop.f32.mrb[0].mxu0
      %v1408 = vadd.f32 %v1281, %v1407
      %v1409 = vpop.f32.mrb[0].mxu0
      %1410 = vmatprep.mubr.f32.mxu0 0.0
      %1411 = vmatmul.mubr.f32.gmra.mrb[0].mxu0 %v1291
      %v1412 = vpop.f32.mrb[0].mxu0
      %v1413 = vadd.f32 %v1281, %v1412
      %v1414 = vpop.f32.mrb[0].mxu0
      %1415 = vmatprep.mubr.f32.mxu0 0.0
      %1416 = vmatmul.mubr.f32.gmra.mrb[0].mxu0 %v1294
      %v1417 = vpop.f32.mrb[0].mxu0
      %v1418 = vadd.f32 %v1281, %v1417
      %v1419 = vpop.f32.mrb[0].mxu0
      %1420 = vmatprep.mubr.f32.mxu0 0.0
      %1421 = vmatmul.mubr.f32.gmra.mrb[0].mxu0 %v1297
      %v1422 = vpop.f32.mrb[0].mxu0
      %v1423 = vadd.f32 %v1281, %v1422
      %v1424 = vpop.f32.mrb[0].mxu0
      %1425 = vmatprep.mubr.f32.mxu0 0.0
      %1426 = vmatmul.mubr.f32.gmra.mrb[0].mxu0 %v1300
      %v1427 = vpop.f32.mrb[0].mxu0
      %v1428 = vadd.f32 %v1281, %v1427
      %v1429 = vpop.f32.mrb[0].mxu0
      %1430 = vmatprep.mubr.f32.mxu0 0.0
      %1431 = vmatmul.mubr.f32.gmra.mrb[0].mxu0 %v1303
      %v1432 = vpop.f32.mrb[0].mxu0
      %v1433 = vadd.f32 %v1281, %v1432
      %v1434 = vpop.f32.mrb[0].mxu0
      %1435 = vmatprep.mubr.f32.mxu0 0.0
      %1436 = vmatmul.mubr.f32.gmra.mrb[0].mxu0 %v1306
      %v1437 = vpop.f32.mrb[0].mxu0
      %v1438 = vadd.f32 %v1281, %v1437
      %v1439 = vpop.f32.mrb[0].mxu0
      %1440 = vmatprep.mubr.f32.mxu0 0.0
      %1441 = vmatmul.mubr.f32.gmra.mrb[0].mxu0 %v1309
      %v1442 = vpop.f32.mrb[0].mxu0
      %v1443 = vadd.f32 %v1281, %v1442
      %v1444 = vpop.f32.mrb[0].mxu0
      %1445 = vmatprep.mubr.f32.mxu0 0.0
      %1446 = vmatmul.mubr.f32.gmra.mrb[0].mxu0 %v1312
      %v1447 = vpop.f32.mrb[0].mxu0
      %v1448 = vadd.f32 %v1281, %v1447
      %v1449 = vpop.f32.mrb[0].mxu0
      %1450 = vmatprep.mubr.f32.mxu0 0.0
      %1451 = vmatmul.mubr.f32.gmra.mrb[0].mxu0 %v1315
      %v1452 = vpop.f32.mrb[0].mxu0
      %v1453 = vadd.f32 %v1281, %v1452
      %v1454 = vpop.f32.mrb[0].mxu0
      %1455 = vmatprep.mubr.f32.mxu0 0.0
      %1456 = vmatmul.mubr.f32.gmra.mrb[0].mxu0 %v1318
      %v1457 = vpop.f32.mrb[0].mxu0
      %v1458 = vadd.f32 %v1281, %v1457
      %v1459 = vpop.f32.mrb[0].mxu0
      %1460 = vmatprep.mubr.f32.mxu0 0.0
      %1461 = vmatmul.mubr.f32.gmra.mrb[0].mxu0 %v1321
      %v1462 = vpop.f32.mrb[0].mxu0
      %v1463 = vadd.f32 %v1281, %v1462
      %v1464 = vpop.f32.mrb[0].mxu0
      %1465 = vmatprep.mubr.f32.mxu0 0.0
      %1466 = vmatmul.mubr.f32.gmra.mrb[0].mxu0 %v1324
      %v1467 = vpop.f32.mrb[0].mxu0
      %v1468 = vadd.f32 %v1281, %v1467
      %v1469 = vpop.f32.mrb[0].mxu0
      %1470 = vmatprep.mubr.f32.mxu0 0.0
      %1471 = vmatmul.mubr.f32.gmra.mrb[0].mxu0 %v1327
      %v1472 = vpop.f32.mrb[0].mxu0
      %v1473 = vadd.f32 %v1281, %v1472
      %v1474 = vpop.f32.mrb[0].mxu0
      %1475 = vmatprep.mubr.f32.mxu0 0.0
      %1476 = vmatmul.mubr.f32.gmra.mrb[0].mxu0 %v1330
      %v1477 = vpop.f32.mrb[0].mxu0
      %v1478 = vadd.f32 %v1281, %v1477
      %v1479 = vpop.f32.mrb[0].mxu0
      %1480 = vdwg.mxu0
      %v1481 = vld [vmem:[%s346] sm:$0xff]
      %v1482 = vld [vmem:[%s346 + $0x8] sm:$0xff]
      %v1483 = vld [vmem:[%s346 + $0x10] sm:$0xff]
      %v1484 = vld [vmem:[%s346 + $0x18] sm:$0xff]
      %v1485 = vld [vmem:[%s346 + $0x20] sm:$0xff]
      %v1486 = vld [vmem:[%s346 + $0x28] sm:$0xff]
      %v1487 = vld [vmem:[%s346 + $0x30] sm:$0xff]
      %v1488 = vld [vmem:[%s346 + $0x38] sm:$0xff]
      %v1489 = vld [vmem:[%s346 + $0x40] sm:$0xff]
      %v1490 = vld [vmem:[%s346 + $0x48] sm:$0xff]
      %v1491 = vld [vmem:[%s346 + $0x50] sm:$0xff]
      %v1492 = vld [vmem:[%s346 + $0x58] sm:$0xff]
      %v1493 = vld [vmem:[%s346 + $0x60] sm:$0xff]
      %v1494 = vld [vmem:[%s346 + $0x68] sm:$0xff]
      %v1495 = vld [vmem:[%s346 + $0x70] sm:$0xff]
      %v1496 = vld [vmem:[%s346 + $0x78] sm:$0xff]
      %v1497 = vadd.f32 %v1481, %v1403
      %v1498 = vadd.f32 %v1482, %v1408
      %v1499 = vadd.f32 %v1483, %v1413
      %v1500 = vadd.f32 %v1484, %v1418
      %v1501 = vadd.f32 %v1485, %v1423
      %v1502 = vadd.f32 %v1486, %v1428
      %v1503 = vadd.f32 %v1487, %v1433
      %v1504 = vadd.f32 %v1488, %v1438
      %v1505 = vadd.f32 %v1489, %v1443
      %v1506 = vadd.f32 %v1490, %v1448
      %v1507 = vadd.f32 %v1491, %v1453
      %v1508 = vadd.f32 %v1492, %v1458
      %v1509 = vadd.f32 %v1493, %v1463
      %v1510 = vadd.f32 %v1494, %v1468
      %v1511 = vadd.f32 %v1495, %v1473
      %v1512 = vadd.f32 %v1496, %v1478
      %1513 = vst.msk [vmem:[%s391] sm:$0xff] %vm393, %v1497
      %1514 = vst.msk [vmem:[%s391 + $0x8] sm:$0xff] %vm393, %v1498
      %1515 = vst.msk [vmem:[%s391 + $0x10] sm:$0xff] %vm393, %v1499
      %1516 = vst.msk [vmem:[%s391 + $0x18] sm:$0xff] %vm393, %v1500
      %1517 = vst.msk [vmem:[%s391 + $0x20] sm:$0xff] %vm393, %v1501
      %1518 = vst.msk [vmem:[%s391 + $0x28] sm:$0xff] %vm393, %v1502
      %1519 = vst.msk [vmem:[%s391 + $0x30] sm:$0xff] %vm393, %v1503
      %1520 = vst.msk [vmem:[%s391 + $0x38] sm:$0xff] %vm393, %v1504
      %1521 = vst.msk [vmem:[%s391 + $0x40] sm:$0xff] %vm393, %v1505
      %1522 = vst.msk [vmem:[%s391 + $0x48] sm:$0xff] %vm393, %v1506
      %1523 = vst.msk [vmem:[%s391 + $0x50] sm:$0xff] %vm393, %v1507
      %1524 = vst.msk [vmem:[%s391 + $0x58] sm:$0xff] %vm393, %v1508
      %1525 = vst.msk [vmem:[%s391 + $0x60] sm:$0xff] %vm393, %v1509
      %1526 = vst.msk [vmem:[%s391 + $0x68] sm:$0xff] %vm393, %v1510
      %1527 = vst.msk [vmem:[%s391 + $0x70] sm:$0xff] %vm393, %v1511
      %1528 = vst.msk [vmem:[%s391 + $0x78] sm:$0xff] %vm393, %v1512
      %s1529 = smul.u32 8, %s21
      %p1530 = scmp.lt.s32.totalorder %s20, 1
      %s1531 = scalar_select %p1530, %s20, 1
      %p1532 = scmp.lt.s32.totalorder %s1529, 15
      %s1533 = scalar_select %p1532, %s1529, 15
      %s1534 = smul.addr %s1533, 2
      %s1535 = smul.addr %s1531, 32
      %s1536 = sadd.s32 %s1534, %s1535
      %s1537 = smul.addr %s1536, 8
      %s1538 = scalar_lea.vmem %s5, %s1537
      // Predicated region
      $region41: #{tpu_custom_call.1} parent=39 // pred_check
        %p1539 = pneg %p190
      $region42: #{tpu_custom_call.1} parent=39 // pred_check_branch
        %1541 = sbr.rel (%p1539) target = $region44
      $region43: #{tpu_custom_call.1} parent=39 // pred_region
        %s1542 = smul.u32 8, %s21
      $region44: #{tpu_custom_call.1} parent=39 // pred_fallthru
        _
    $region40: #{tpu_custom_call.1} parent=5 // pred_fallthru
      _
    %p1543 = scmp.le.s32.totalorder 2, %s11
    // Predicated region
    $region45: #{tpu_custom_call.1} parent=5 // pred_check
      %p1544 = pneg %p1543
    $region46: #{tpu_custom_call.1} parent=5 // pred_check_branch
      %1546 = sbr.rel (%p1544) target = $region48
    $region47: #{tpu_custom_call.1} parent=5 // pred_region
      %s1547 = ssub.s32 %s11, 2
      // Predicated region
      $region49: #{tpu_custom_call.1} parent=47 // pred_check
        %p1548 = pneg %p196
      $region50: #{tpu_custom_call.1} parent=47 // pred_check_branch
        %1550 = sbr.rel (%p1548) target = $region52
      $region51: #{tpu_custom_call.1} parent=47 // pred_region
        %s1551 = smul.u32 8, %s23
        %p1552 = scmp.lt.s32.totalorder %s22, 1
        %s1553 = scalar_select %p1552, %s22, 1
        %p1554 = scmp.lt.s32.totalorder %s1551, 15
        %s1555 = scalar_select %p1554, %s1551, 15
        %s1556 = smul.addr %s1555, 2
        %s1557 = smul.addr %s1553, 32
        %s1558 = sadd.s32 %s1556, %s1557
        %s1559 = smul.addr %s1558, 8
        %s1560 = scalar_lea.vmem %s5, %s1559
      $region52: #{tpu_custom_call.1} parent=47 // pred_fallthru
        _
    $region48: #{tpu_custom_call.1} parent=5 // pred_fallthru
      _
  $region6: #{tpu_custom_call.1} parent=0 // loop_footer
    %s15 = sadd.s32 1, %s11
  $region7: #{tpu_custom_call.1} parent=0 // loop_footer_branch
    %10 = sbr.rel target = $region3
  $region8: #{tpu_custom_call.1} parent=0 // loop_exit
    _

</llo_original>
